<compile_context>
chip_gen: v5e
topology: v5e:2x2
jax: 0.10.0
libtpu: 0.0.40
codegen_flags: <defaults>
</compile_context>

<pallas_src>
import functools

import jax
import jax.numpy as jnp
from jax.experimental import pallas as pl
from jax.experimental.pallas import tpu as pltpu


# ----------------------------- hparams ------------------------------------ #
class HParams:
    def __init__(self, **kw):
        self.__dict__.update(kw)


def build_dilations(hp):
    dils = []
    for b in range(hp.blocks):
        actual = hp.layers if b != hp.blocks - 1 else hp.layers - 1
        d = 1
        for _ in range(actual):
            dils.append(d)
            d *= 2
    return dils


# --------------------------- fused Pallas kernel --------------------------- #
def _causal_shift(a, d):
    """a[:, t] -> a[:, t - d] with zero fill for t < d (d is a static int)."""
    if d == 0:
        return a
    rolled = pltpu.roll(a, shift=d, axis=1)              # XLU lane rotation
    t_idx = jax.lax.broadcasted_iota(jnp.int32, a.shape, 1)
    return jnp.where(t_idx >= d, rolled, jnp.zeros_like(rolled))


def _wavenet_kernel(x_ref, cond_ref, w_start_ref, w_dil_ref, w_cond_ref,
                    w_rs_ref, w_ce_ref, w_end_ref, out_ref,
                    *, dilations, cr, cd, cs, apply_sigmoid):
    x_in = x_ref[0]          # (Cin, T)   -- time on lanes
    cond = cond_ref[0]       # (Ccond, T)
    T = x_in.shape[-1]

    # Start causal conv (kernel = initial_kernel = 2): both taps in one matmul;
    # the tap-0 result is shifted afterwards (shift is linear & zero-filled).
    y0 = jnp.dot(w_start_ref[...], x_in, preferred_element_type=jnp.float32)   # (2Cr, T)
    x = _causal_shift(y0[:cr], 1) + y0[cr:]                                    # (Cr, T)

    # Hoisted condition 1x1 convs for every layer: one matmul, sliced per layer.
    cond_proj = jnp.dot(w_cond_ref[...], cond,
                        preferred_element_type=jnp.float32)                    # (L*2Cd, T)

    skip = jnp.zeros((cs, T), jnp.float32)
    for l, d in enumerate(dilations):          # static unroll over layers
        # Dilated conv: both taps via one (4Cd, Cr) @ (Cr, T) matmul.
        y = jnp.dot(w_dil_ref[l], x, preferred_element_type=jnp.float32)       # (4Cd, T)
        dil = (_causal_shift(y[:2 * cd], d) + y[2 * cd:]
               + cond_proj[2 * cd * l:2 * cd * (l + 1)])                       # (2Cd, T)
        z = jnp.tanh(dil[:cd]) * jax.nn.sigmoid(dil[cd:])                      # (Cd, T)
        # Residual + skip 1x1 convs merged into one (Cr+Cs, Cd) @ (Cd, T).
        rs = jnp.dot(w_rs_ref[l], z, preferred_element_type=jnp.float32)       # (Cr+Cs, T)
        x = x + rs[:cr]
        skip = skip + rs[cr:]

    s = jnp.tanh(skip + jnp.dot(w_ce_ref[...], cond,
                                preferred_element_type=jnp.float32))           # (Cs, T)
    out = jnp.dot(w_end_ref[...], s, preferred_element_type=jnp.float32)       # (Cout, T)
    if apply_sigmoid:
        out = jax.nn.sigmoid(out)
    out_ref[0] = out


# ------------------------- parameter init / packing ------------------------ #
def _xavier(key, shape):
    # shape = (out_channels, in_channels, kernel); gain('linear') == 1.0
    out_c, in_c, k = shape
    fan_in, fan_out = in_c * k, out_c * k
    a = (6.0 / (fan_in + fan_out)) ** 0.5
    return jax.random.uniform(key, shape, jnp.float32, -a, a)


def init_params(key, hp):
    dils = build_dilations(hp)
    n = len(dils)
    keys = jax.random.split(key, 4 * n + 3)
    params = {
        "start_w": _xavier(keys[0], (hp.residual_channels, hp.input_channel,
                                     hp.initial_kernel)),
        "end_w": _xavier(keys[1], (hp.output_channel, hp.skip_channels, 1)),
        "cond_end_w": _xavier(keys[2], (hp.skip_channels, hp.condition_channel, 1)),
        "layers": [],
    }
    for i in range(n):
        ks = keys[3 + 4 * i: 3 + 4 * i + 4]
        params["layers"].append({
            "wd": _xavier(ks[0], (2 * hp.dilation_channels, hp.residual_channels,
                                  hp.kernel_size)),
            "wc": _xavier(ks[1], (2 * hp.dilation_channels, hp.condition_channel, 1)),
            "wr": _xavier(ks[2], (hp.residual_channels, hp.dilation_channels, 1)),
            "ws": _xavier(ks[3], (hp.skip_channels, hp.dilation_channels, 1)),
        })
    return params


def pack_params(params):
    """Torch Conv1d weights (out, in, K) -> MXU-friendly stacked matrices."""
    sw = params["start_w"]
    w_start = jnp.concatenate([sw[:, :, 0], sw[:, :, 1]], axis=0)        # (2Cr, Cin)
    w_dil = jnp.stack(
        [jnp.concatenate([lp["wd"][:, :, 0], lp["wd"][:, :, 1]], axis=0)
         for lp in params["layers"]], axis=0)                            # (L, 4Cd, Cr)
    w_cond = jnp.concatenate([lp["wc"][:, :, 0] for lp in params["layers"]],
                             axis=0)                                     # (L*2Cd, Ccond)
    w_rs = jnp.stack(
        [jnp.concatenate([lp["wr"][:, :, 0], lp["ws"][:, :, 0]], axis=0)
         for lp in params["layers"]], axis=0)                            # (L, Cr+Cs, Cd)
    w_ce = params["cond_end_w"][:, :, 0]                                 # (Cs, Ccond)
    w_end = params["end_w"][:, :, 0]                                     # (Cout, Cs)
    return w_start, w_dil, w_cond, w_rs, w_ce, w_end


# ------------------------------ forward paths ------------------------------ #
def _pallas_wavenet(params, noisy_nct, cond_nct, hp):
    w_start, w_dil, w_cond, w_rs, w_ce, w_end = pack_params(params)
    B, c_in, T = noisy_nct.shape
    c_cond = cond_nct.shape[1]
    dils = tuple(build_dilations(hp))
    cr, cd, cs = hp.residual_channels, hp.dilation_channels, hp.skip_channels
    c_out = hp.output_channel

    kernel = functools.partial(
        _wavenet_kernel, dilations=dils, cr=cr, cd=cd, cs=cs,
        apply_sigmoid=(hp.type == 2))

    def resident(arr):
        # Whole-array block with constant index_map: fetched once, stays in
        # VMEM across the (parallel) batch grid, never re-DMA'd.
        if arr.ndim == 2:
            return pl.BlockSpec(arr.shape, lambda b: (0, 0))
        return pl.BlockSpec(arr.shape, lambda b: (0, 0, 0))

    return pl.pallas_call(
        kernel,
        grid=(B,),
        in_specs=[
            pl.BlockSpec((1, c_in, T), lambda b: (b, 0, 0)),
            pl.BlockSpec((1, c_cond, T), lambda b: (b, 0, 0)),
            resident(w_start), resident(w_dil), resident(w_cond),
            resident(w_rs), resident(w_ce), resident(w_end),
        ],
        out_specs=pl.BlockSpec((1, c_out, T), lambda b: (b, 0, 0)),
        out_shape=jax.ShapeDtypeStruct((B, c_out, T), jnp.float32),
        compiler_params=pltpu.CompilerParams(
            dimension_semantics=("parallel",),
            vmem_limit_bytes=48 * 1024 * 1024),
    )(noisy_nct, cond_nct, w_start, w_dil, w_cond, w_rs, w_ce, w_end)


def _ref_wavenet(params, x_nct, cond_nct, hp):
    """Pure-JAX reference with independent math (NCT layout), for checking."""
    def cshift(a, d):
        if d == 0:
            return a
        return jnp.pad(a, ((0, 0), (0, 0), (d, 0)))[:, :, :a.shape[2]]

    def conv1x1(w, a):  # w: (out, in), a: (B, in, T)
        return jnp.einsum("oi,bit->bot", w, a)

    cd = hp.dilation_channels
    sw = params["start_w"]
    x = conv1x1(sw[:, :, 0], cshift(x_nct, 1)) + conv1x1(sw[:, :, 1], x_nct)
    skip = 0.0
    for i, d in enumerate(build_dilations(hp)):
        lp = params["layers"][i]
        dil = (conv1x1(lp["wd"][:, :, 0], cshift(x, d))
               + conv1x1(lp["wd"][:, :, 1], x)
               + conv1x1(lp["wc"][:, :, 0], cond_nct))
        z = jnp.tanh(dil[:, :cd]) * jax.nn.sigmoid(dil[:, cd:])
        skip = skip + conv1x1(lp["ws"][:, :, 0], z)
        x = x + conv1x1(lp["wr"][:, :, 0], z)
    s = jnp.tanh(skip + conv1x1(params["cond_end_w"][:, :, 0], cond_nct))
    out = conv1x1(params["end_w"][:, :, 0], s)
    if hp.type == 2:
        out = jax.nn.sigmoid(out)
    return out


def wavenet_forward(params, input_nct, cond_nct, hp, noise_key, use_pallas=True):
    # forward(): x = wavenet(Normal(input, noise_lambda).sample(), condition)
    noisy = input_nct + hp.noise_lambda * jax.random.normal(
        noise_key, input_nct.shape, jnp.float32)
    if use_pallas:
        return _pallas_wavenet(params, noisy, cond_nct, hp)
    return _ref_wavenet(params, noisy, cond_nct, hp)


# ------------------------------- main -------------------------------------- #
if __name__ == "__main__":
    hp = HParams(
        type=2,
        layers=3,
        blocks=2,
        dilation_channels=32,
        residual_channels=32,
        skip_channels=32,
        input_channel=4,
        initial_kernel=2,
        kernel_size=2,
        output_channel=4,
        sample_channel=4,
        condition_channel=4,
        bias=False,           # only weights are xavier-initialised in the reference
        noise_lambda=0.2,
    )
    assert hp.kernel_size == 2 and hp.initial_kernel == 2  # documented assumption

    key = jax.random.PRNGKey(0)
    k_param, k_in, k_cond, k_noise = jax.random.split(key, 4)

    params = init_params(k_param, hp)

    B, T = 2, 16
    x = jax.random.normal(k_in, (B, hp.input_channel, T), jnp.float32)
    condition = jax.random.normal(k_cond, (B, hp.condition_channel, T), jnp.float32)

    out = wavenet_forward(params, x, condition, hp, k_noise, use_pallas=True)
    out = jax.block_until_ready(out)

    # quiet correctness check against a pure-JAX reference with identical math
    ref = wavenet_forward(params, x, condition, hp, k_noise, use_pallas=False)
    assert out.shape == (B, hp.output_channel, T)
    assert jnp.allclose(out, ref, rtol=1e-4, atol=1e-4), \
        float(jnp.max(jnp.abs(out - ref)))

    print("KERNEL_OK")
</pallas_src>

<mosaic_0001>
module attributes {stable_mosaic.version = 11 : i64} {
  func.func @_wavenet_kernel(%arg0: i32, %arg1: memref<1x4x16xf32, #tpu.memory_space<vmem>>, %arg2: memref<1x4x16xf32, #tpu.memory_space<vmem>>, %arg3: memref<64x4xf32, #tpu.memory_space<vmem>>, %arg4: memref<5x128x32xf32, #tpu.memory_space<vmem>>, %arg5: memref<320x4xf32, #tpu.memory_space<vmem>>, %arg6: memref<5x64x32xf32, #tpu.memory_space<vmem>>, %arg7: memref<32x4xf32, #tpu.memory_space<vmem>>, %arg8: memref<4x32xf32, #tpu.memory_space<vmem>>, %arg9: memref<1x4x16xf32, #tpu.memory_space<vmem>>) attributes {dimension_semantics = [#tpu.dimension_semantics<parallel>], iteration_bounds = array<i64: 2>, scalar_prefetch = 0 : i64, scratch_operands = 0 : i64, tpu.core_type = #tpu.core_type<tc>, window_params = [{transform_indices = @transform_0, window_bounds = array<i64: 1, 4, 16>}, {transform_indices = @transform_1, window_bounds = array<i64: 1, 4, 16>}, {pipeline_mode = #tpu.pipeline_mode<synchronous>, transform_indices = @transform_2, window_bounds = array<i64: 64, 4>}, {pipeline_mode = #tpu.pipeline_mode<synchronous>, transform_indices = @transform_3, window_bounds = array<i64: 5, 128, 32>}, {pipeline_mode = #tpu.pipeline_mode<synchronous>, transform_indices = @transform_4, window_bounds = array<i64: 320, 4>}, {pipeline_mode = #tpu.pipeline_mode<synchronous>, transform_indices = @transform_5, window_bounds = array<i64: 5, 64, 32>}, {pipeline_mode = #tpu.pipeline_mode<synchronous>, transform_indices = @transform_6, window_bounds = array<i64: 32, 4>}, {pipeline_mode = #tpu.pipeline_mode<synchronous>, transform_indices = @transform_7, window_bounds = array<i64: 4, 32>}, {transform_indices = @transform_8, window_bounds = array<i64: 1, 4, 16>}]} {
    %c0 = arith.constant 0 : index
    %c0_0 = arith.constant 0 : index
    %c0_1 = arith.constant 0 : index
    %0 = vector.load %arg1[%c0, %c0_0, %c0_1] : memref<1x4x16xf32, #tpu.memory_space<vmem>>, vector<1x4x16xf32>
    %1 = vector.shape_cast %0 : vector<1x4x16xf32> to vector<4x16xf32>
    %c0_2 = arith.constant 0 : index
    %c0_3 = arith.constant 0 : index
    %c0_4 = arith.constant 0 : index
    %2 = vector.load %arg2[%c0_2, %c0_3, %c0_4] : memref<1x4x16xf32, #tpu.memory_space<vmem>>, vector<1x4x16xf32>
    %3 = vector.shape_cast %2 : vector<1x4x16xf32> to vector<4x16xf32>
    %c0_5 = arith.constant 0 : index
    %c0_6 = arith.constant 0 : index
    %4 = vector.load %arg3[%c0_5, %c0_6] : memref<64x4xf32, #tpu.memory_space<vmem>>, vector<64x4xf32>
    %cst = arith.constant dense<0.000000e+00> : vector<64x16xf32>
    %5 = tpu.matmul %4, %1, %cst {dimension_numbers = #tpu.dot_dimension_numbers<[1], [0], [0], [1], [0, 0, 1, 1], [], []>} : vector<64x4xf32>, vector<4x16xf32>, vector<64x16xf32> -> vector<64x16xf32>
    %6 = vector.extract_strided_slice %5 {offsets = [0, 0], sizes = [32, 16], strides = [1, 1]} : vector<64x16xf32> to vector<32x16xf32>
    %c1_i32 = arith.constant 1 : i32
    %7 = tpu.dynamic_rotate %6 by %c1_i32 dim 1 : vector<32x16xf32>, i32 -> vector<32x16xf32>
    %8 = tpu.iota {dimensions = array<i32: 1>} : vector<32x16xi32>
    %c1_i32_7 = arith.constant 1 : i32
    %9 = vector.broadcast %c1_i32_7 : i32 to vector<32x16xi32>
    %10 = arith.cmpi sge, %8, %9 : vector<32x16xi32>
    %cst_8 = arith.constant 0.000000e+00 : f32
    %11 = vector.broadcast %cst_8 : f32 to vector<32x16xf32>
    %12 = arith.select %10, %7, %11 : vector<32x16xi1>, vector<32x16xf32>
    %13 = vector.extract_strided_slice %5 {offsets = [32, 0], sizes = [32, 16], strides = [1, 1]} : vector<64x16xf32> to vector<32x16xf32>
    %14 = arith.addf %12, %13 : vector<32x16xf32>
    %c0_9 = arith.constant 0 : index
    %c0_10 = arith.constant 0 : index
    %15 = vector.load %arg5[%c0_9, %c0_10] : memref<320x4xf32, #tpu.memory_space<vmem>>, vector<320x4xf32>
    %cst_11 = arith.constant dense<0.000000e+00> : vector<320x16xf32>
    %16 = tpu.matmul %15, %3, %cst_11 {dimension_numbers = #tpu.dot_dimension_numbers<[1], [0], [0], [1], [0, 0, 1, 1], [], []>} : vector<320x4xf32>, vector<4x16xf32>, vector<320x16xf32> -> vector<320x16xf32>
    %cst_12 = arith.constant 0.000000e+00 : f32
    %17 = vector.broadcast %cst_12 : f32 to vector<32x16xf32>
    %c0_13 = arith.constant 0 : index
    %c0_14 = arith.constant 0 : index
    %c0_15 = arith.constant 0 : index
    %18 = vector.load %arg4[%c0_13, %c0_14, %c0_15] : memref<5x128x32xf32, #tpu.memory_space<vmem>>, vector<1x128x32xf32>
    %19 = vector.shape_cast %18 : vector<1x128x32xf32> to vector<128x32xf32>
    %cst_16 = arith.constant dense<0.000000e+00> : vector<128x16xf32>
    %20 = tpu.matmul %19, %14, %cst_16 {dimension_numbers = #tpu.dot_dimension_numbers<[1], [0], [0], [1], [0, 0, 1, 1], [], []>} : vector<128x32xf32>, vector<32x16xf32>, vector<128x16xf32> -> vector<128x16xf32>
    %21 = vector.extract_strided_slice %20 {offsets = [0, 0], sizes = [64, 16], strides = [1, 1]} : vector<128x16xf32> to vector<64x16xf32>
    %c1_i32_17 = arith.constant 1 : i32
    %22 = tpu.dynamic_rotate %21 by %c1_i32_17 dim 1 : vector<64x16xf32>, i32 -> vector<64x16xf32>
    %23 = tpu.iota {dimensions = array<i32: 1>} : vector<64x16xi32>
    %c1_i32_18 = arith.constant 1 : i32
    %24 = vector.broadcast %c1_i32_18 : i32 to vector<64x16xi32>
    %25 = arith.cmpi sge, %23, %24 : vector<64x16xi32>
    %cst_19 = arith.constant 0.000000e+00 : f32
    %26 = vector.broadcast %cst_19 : f32 to vector<64x16xf32>
    %27 = arith.select %25, %22, %26 : vector<64x16xi1>, vector<64x16xf32>
    %28 = vector.extract_strided_slice %20 {offsets = [64, 0], sizes = [64, 16], strides = [1, 1]} : vector<128x16xf32> to vector<64x16xf32>
    %29 = arith.addf %27, %28 : vector<64x16xf32>
    %30 = vector.extract_strided_slice %16 {offsets = [0, 0], sizes = [64, 16], strides = [1, 1]} : vector<320x16xf32> to vector<64x16xf32>
    %31 = arith.addf %29, %30 : vector<64x16xf32>
    %32 = vector.extract_strided_slice %31 {offsets = [0, 0], sizes = [32, 16], strides = [1, 1]} : vector<64x16xf32> to vector<32x16xf32>
    %33 = math.tanh %32 : vector<32x16xf32>
    %34 = vector.extract_strided_slice %31 {offsets = [32, 0], sizes = [32, 16], strides = [1, 1]} : vector<64x16xf32> to vector<32x16xf32>
    %35 = arith.negf %34 : vector<32x16xf32>
    %36 = math.exp %35 : vector<32x16xf32>
    %cst_20 = arith.constant 1.000000e+00 : f32
    %37 = vector.broadcast %cst_20 : f32 to vector<32x16xf32>
    %38 = arith.addf %37, %36 : vector<32x16xf32>
    %39 = arith.divf %37, %38 : vector<32x16xf32>
    %40 = arith.mulf %33, %39 : vector<32x16xf32>
    %c0_21 = arith.constant 0 : index
    %c0_22 = arith.constant 0 : index
    %c0_23 = arith.constant 0 : index
    %41 = vector.load %arg6[%c0_21, %c0_22, %c0_23] : memref<5x64x32xf32, #tpu.memory_space<vmem>>, vector<1x64x32xf32>
    %42 = vector.shape_cast %41 : vector<1x64x32xf32> to vector<64x32xf32>
    %cst_24 = arith.constant dense<0.000000e+00> : vector<64x16xf32>
    %43 = tpu.matmul %42, %40, %cst_24 {dimension_numbers = #tpu.dot_dimension_numbers<[1], [0], [0], [1], [0, 0, 1, 1], [], []>} : vector<64x32xf32>, vector<32x16xf32>, vector<64x16xf32> -> vector<64x16xf32>
    %44 = vector.extract_strided_slice %43 {offsets = [0, 0], sizes = [32, 16], strides = [1, 1]} : vector<64x16xf32> to vector<32x16xf32>
    %45 = arith.addf %14, %44 : vector<32x16xf32>
    %46 = vector.extract_strided_slice %43 {offsets = [32, 0], sizes = [32, 16], strides = [1, 1]} : vector<64x16xf32> to vector<32x16xf32>
    %47 = arith.addf %17, %46 : vector<32x16xf32>
    %c1 = arith.constant 1 : index
    %c0_25 = arith.constant 0 : index
    %c0_26 = arith.constant 0 : index
    %48 = vector.load %arg4[%c1, %c0_25, %c0_26] : memref<5x128x32xf32, #tpu.memory_space<vmem>>, vector<1x128x32xf32>
    %49 = vector.shape_cast %48 : vector<1x128x32xf32> to vector<128x32xf32>
    %cst_27 = arith.constant dense<0.000000e+00> : vector<128x16xf32>
    %50 = tpu.matmul %49, %45, %cst_27 {dimension_numbers = #tpu.dot_dimension_numbers<[1], [0], [0], [1], [0, 0, 1, 1], [], []>} : vector<128x32xf32>, vector<32x16xf32>, vector<128x16xf32> -> vector<128x16xf32>
    %51 = vector.extract_strided_slice %50 {offsets = [0, 0], sizes = [64, 16], strides = [1, 1]} : vector<128x16xf32> to vector<64x16xf32>
    %c2_i32 = arith.constant 2 : i32
    %52 = tpu.dynamic_rotate %51 by %c2_i32 dim 1 : vector<64x16xf32>, i32 -> vector<64x16xf32>
    %53 = tpu.iota {dimensions = array<i32: 1>} : vector<64x16xi32>
    %c2_i32_28 = arith.constant 2 : i32
    %54 = vector.broadcast %c2_i32_28 : i32 to vector<64x16xi32>
    %55 = arith.cmpi sge, %53, %54 : vector<64x16xi32>
    %cst_29 = arith.constant 0.000000e+00 : f32
    %56 = vector.broadcast %cst_29 : f32 to vector<64x16xf32>
    %57 = arith.select %55, %52, %56 : vector<64x16xi1>, vector<64x16xf32>
    %58 = vector.extract_strided_slice %50 {offsets = [64, 0], sizes = [64, 16], strides = [1, 1]} : vector<128x16xf32> to vector<64x16xf32>
    %59 = arith.addf %57, %58 : vector<64x16xf32>
    %60 = vector.extract_strided_slice %16 {offsets = [64, 0], sizes = [64, 16], strides = [1, 1]} : vector<320x16xf32> to vector<64x16xf32>
    %61 = arith.addf %59, %60 : vector<64x16xf32>
    %62 = vector.extract_strided_slice %61 {offsets = [0, 0], sizes = [32, 16], strides = [1, 1]} : vector<64x16xf32> to vector<32x16xf32>
    %63 = math.tanh %62 : vector<32x16xf32>
    %64 = vector.extract_strided_slice %61 {offsets = [32, 0], sizes = [32, 16], strides = [1, 1]} : vector<64x16xf32> to vector<32x16xf32>
    %65 = arith.negf %64 : vector<32x16xf32>
    %66 = math.exp %65 : vector<32x16xf32>
    %cst_30 = arith.constant 1.000000e+00 : f32
    %67 = vector.broadcast %cst_30 : f32 to vector<32x16xf32>
    %68 = arith.addf %67, %66 : vector<32x16xf32>
    %69 = arith.divf %67, %68 : vector<32x16xf32>
    %70 = arith.mulf %63, %69 : vector<32x16xf32>
    %c1_31 = arith.constant 1 : index
    %c0_32 = arith.constant 0 : index
    %c0_33 = arith.constant 0 : index
    %71 = vector.load %arg6[%c1_31, %c0_32, %c0_33] : memref<5x64x32xf32, #tpu.memory_space<vmem>>, vector<1x64x32xf32>
    %72 = vector.shape_cast %71 : vector<1x64x32xf32> to vector<64x32xf32>
    %cst_34 = arith.constant dense<0.000000e+00> : vector<64x16xf32>
    %73 = tpu.matmul %72, %70, %cst_34 {dimension_numbers = #tpu.dot_dimension_numbers<[1], [0], [0], [1], [0, 0, 1, 1], [], []>} : vector<64x32xf32>, vector<32x16xf32>, vector<64x16xf32> -> vector<64x16xf32>
    %74 = vector.extract_strided_slice %73 {offsets = [0, 0], sizes = [32, 16], strides = [1, 1]} : vector<64x16xf32> to vector<32x16xf32>
    %75 = arith.addf %45, %74 : vector<32x16xf32>
    %76 = vector.extract_strided_slice %73 {offsets = [32, 0], sizes = [32, 16], strides = [1, 1]} : vector<64x16xf32> to vector<32x16xf32>
    %77 = arith.addf %47, %76 : vector<32x16xf32>
    %c2 = arith.constant 2 : index
    %c0_35 = arith.constant 0 : index
    %c0_36 = arith.constant 0 : index
    %78 = vector.load %arg4[%c2, %c0_35, %c0_36] : memref<5x128x32xf32, #tpu.memory_space<vmem>>, vector<1x128x32xf32>
    %79 = vector.shape_cast %78 : vector<1x128x32xf32> to vector<128x32xf32>
    %cst_37 = arith.constant dense<0.000000e+00> : vector<128x16xf32>
    %80 = tpu.matmul %79, %75, %cst_37 {dimension_numbers = #tpu.dot_dimension_numbers<[1], [0], [0], [1], [0, 0, 1, 1], [], []>} : vector<128x32xf32>, vector<32x16xf32>, vector<128x16xf32> -> vector<128x16xf32>
    %81 = vector.extract_strided_slice %80 {offsets = [0, 0], sizes = [64, 16], strides = [1, 1]} : vector<128x16xf32> to vector<64x16xf32>
    %c4_i32 = arith.constant 4 : i32
    %82 = tpu.dynamic_rotate %81 by %c4_i32 dim 1 : vector<64x16xf32>, i32 -> vector<64x16xf32>
    %83 = tpu.iota {dimensions = array<i32: 1>} : vector<64x16xi32>
    %c4_i32_38 = arith.constant 4 : i32
    %84 = vector.broadcast %c4_i32_38 : i32 to vector<64x16xi32>
    %85 = arith.cmpi sge, %83, %84 : vector<64x16xi32>
    %cst_39 = arith.constant 0.000000e+00 : f32
    %86 = vector.broadcast %cst_39 : f32 to vector<64x16xf32>
    %87 = arith.select %85, %82, %86 : vector<64x16xi1>, vector<64x16xf32>
    %88 = vector.extract_strided_slice %80 {offsets = [64, 0], sizes = [64, 16], strides = [1, 1]} : vector<128x16xf32> to vector<64x16xf32>
    %89 = arith.addf %87, %88 : vector<64x16xf32>
    %90 = vector.extract_strided_slice %16 {offsets = [128, 0], sizes = [64, 16], strides = [1, 1]} : vector<320x16xf32> to vector<64x16xf32>
    %91 = arith.addf %89, %90 : vector<64x16xf32>
    %92 = vector.extract_strided_slice %91 {offsets = [0, 0], sizes = [32, 16], strides = [1, 1]} : vector<64x16xf32> to vector<32x16xf32>
    %93 = math.tanh %92 : vector<32x16xf32>
    %94 = vector.extract_strided_slice %91 {offsets = [32, 0], sizes = [32, 16], strides = [1, 1]} : vector<64x16xf32> to vector<32x16xf32>
    %95 = arith.negf %94 : vector<32x16xf32>
    %96 = math.exp %95 : vector<32x16xf32>
    %cst_40 = arith.constant 1.000000e+00 : f32
    %97 = vector.broadcast %cst_40 : f32 to vector<32x16xf32>
    %98 = arith.addf %97, %96 : vector<32x16xf32>
    %99 = arith.divf %97, %98 : vector<32x16xf32>
    %100 = arith.mulf %93, %99 : vector<32x16xf32>
    %c2_41 = arith.constant 2 : index
    %c0_42 = arith.constant 0 : index
    %c0_43 = arith.constant 0 : index
    %101 = vector.load %arg6[%c2_41, %c0_42, %c0_43] : memref<5x64x32xf32, #tpu.memory_space<vmem>>, vector<1x64x32xf32>
    %102 = vector.shape_cast %101 : vector<1x64x32xf32> to vector<64x32xf32>
    %cst_44 = arith.constant dense<0.000000e+00> : vector<64x16xf32>
    %103 = tpu.matmul %102, %100, %cst_44 {dimension_numbers = #tpu.dot_dimension_numbers<[1], [0], [0], [1], [0, 0, 1, 1], [], []>} : vector<64x32xf32>, vector<32x16xf32>, vector<64x16xf32> -> vector<64x16xf32>
    %104 = vector.extract_strided_slice %103 {offsets = [0, 0], sizes = [32, 16], strides = [1, 1]} : vector<64x16xf32> to vector<32x16xf32>
    %105 = arith.addf %75, %104 : vector<32x16xf32>
    %106 = vector.extract_strided_slice %103 {offsets = [32, 0], sizes = [32, 16], strides = [1, 1]} : vector<64x16xf32> to vector<32x16xf32>
    %107 = arith.addf %77, %106 : vector<32x16xf32>
    %c3 = arith.constant 3 : index
    %c0_45 = arith.constant 0 : index
    %c0_46 = arith.constant 0 : index
    %108 = vector.load %arg4[%c3, %c0_45, %c0_46] : memref<5x128x32xf32, #tpu.memory_space<vmem>>, vector<1x128x32xf32>
    %109 = vector.shape_cast %108 : vector<1x128x32xf32> to vector<128x32xf32>
    %cst_47 = arith.constant dense<0.000000e+00> : vector<128x16xf32>
    %110 = tpu.matmul %109, %105, %cst_47 {dimension_numbers = #tpu.dot_dimension_numbers<[1], [0], [0], [1], [0, 0, 1, 1], [], []>} : vector<128x32xf32>, vector<32x16xf32>, vector<128x16xf32> -> vector<128x16xf32>
    %111 = vector.extract_strided_slice %110 {offsets = [0, 0], sizes = [64, 16], strides = [1, 1]} : vector<128x16xf32> to vector<64x16xf32>
    %c1_i32_48 = arith.constant 1 : i32
    %112 = tpu.dynamic_rotate %111 by %c1_i32_48 dim 1 : vector<64x16xf32>, i32 -> vector<64x16xf32>
    %113 = tpu.iota {dimensions = array<i32: 1>} : vector<64x16xi32>
    %c1_i32_49 = arith.constant 1 : i32
    %114 = vector.broadcast %c1_i32_49 : i32 to vector<64x16xi32>
    %115 = arith.cmpi sge, %113, %114 : vector<64x16xi32>
    %cst_50 = arith.constant 0.000000e+00 : f32
    %116 = vector.broadcast %cst_50 : f32 to vector<64x16xf32>
    %117 = arith.select %115, %112, %116 : vector<64x16xi1>, vector<64x16xf32>
    %118 = vector.extract_strided_slice %110 {offsets = [64, 0], sizes = [64, 16], strides = [1, 1]} : vector<128x16xf32> to vector<64x16xf32>
    %119 = arith.addf %117, %118 : vector<64x16xf32>
    %120 = vector.extract_strided_slice %16 {offsets = [192, 0], sizes = [64, 16], strides = [1, 1]} : vector<320x16xf32> to vector<64x16xf32>
    %121 = arith.addf %119, %120 : vector<64x16xf32>
    %122 = vector.extract_strided_slice %121 {offsets = [0, 0], sizes = [32, 16], strides = [1, 1]} : vector<64x16xf32> to vector<32x16xf32>
    %123 = math.tanh %122 : vector<32x16xf32>
    %124 = vector.extract_strided_slice %121 {offsets = [32, 0], sizes = [32, 16], strides = [1, 1]} : vector<64x16xf32> to vector<32x16xf32>
    %125 = arith.negf %124 : vector<32x16xf32>
    %126 = math.exp %125 : vector<32x16xf32>
    %cst_51 = arith.constant 1.000000e+00 : f32
    %127 = vector.broadcast %cst_51 : f32 to vector<32x16xf32>
    %128 = arith.addf %127, %126 : vector<32x16xf32>
    %129 = arith.divf %127, %128 : vector<32x16xf32>
    %130 = arith.mulf %123, %129 : vector<32x16xf32>
    %c3_52 = arith.constant 3 : index
    %c0_53 = arith.constant 0 : index
    %c0_54 = arith.constant 0 : index
    %131 = vector.load %arg6[%c3_52, %c0_53, %c0_54] : memref<5x64x32xf32, #tpu.memory_space<vmem>>, vector<1x64x32xf32>
    %132 = vector.shape_cast %131 : vector<1x64x32xf32> to vector<64x32xf32>
    %cst_55 = arith.constant dense<0.000000e+00> : vector<64x16xf32>
    %133 = tpu.matmul %132, %130, %cst_55 {dimension_numbers = #tpu.dot_dimension_numbers<[1], [0], [0], [1], [0, 0, 1, 1], [], []>} : vector<64x32xf32>, vector<32x16xf32>, vector<64x16xf32> -> vector<64x16xf32>
    %134 = vector.extract_strided_slice %133 {offsets = [0, 0], sizes = [32, 16], strides = [1, 1]} : vector<64x16xf32> to vector<32x16xf32>
    %135 = arith.addf %105, %134 : vector<32x16xf32>
    %136 = vector.extract_strided_slice %133 {offsets = [32, 0], sizes = [32, 16], strides = [1, 1]} : vector<64x16xf32> to vector<32x16xf32>
    %137 = arith.addf %107, %136 : vector<32x16xf32>
    %c4 = arith.constant 4 : index
    %c0_56 = arith.constant 0 : index
    %c0_57 = arith.constant 0 : index
    %138 = vector.load %arg4[%c4, %c0_56, %c0_57] : memref<5x128x32xf32, #tpu.memory_space<vmem>>, vector<1x128x32xf32>
    %139 = vector.shape_cast %138 : vector<1x128x32xf32> to vector<128x32xf32>
    %cst_58 = arith.constant dense<0.000000e+00> : vector<128x16xf32>
    %140 = tpu.matmul %139, %135, %cst_58 {dimension_numbers = #tpu.dot_dimension_numbers<[1], [0], [0], [1], [0, 0, 1, 1], [], []>} : vector<128x32xf32>, vector<32x16xf32>, vector<128x16xf32> -> vector<128x16xf32>
    %141 = vector.extract_strided_slice %140 {offsets = [0, 0], sizes = [64, 16], strides = [1, 1]} : vector<128x16xf32> to vector<64x16xf32>
    %c2_i32_59 = arith.constant 2 : i32
    %142 = tpu.dynamic_rotate %141 by %c2_i32_59 dim 1 : vector<64x16xf32>, i32 -> vector<64x16xf32>
    %143 = tpu.iota {dimensions = array<i32: 1>} : vector<64x16xi32>
    %c2_i32_60 = arith.constant 2 : i32
    %144 = vector.broadcast %c2_i32_60 : i32 to vector<64x16xi32>
    %145 = arith.cmpi sge, %143, %144 : vector<64x16xi32>
    %cst_61 = arith.constant 0.000000e+00 : f32
    %146 = vector.broadcast %cst_61 : f32 to vector<64x16xf32>
    %147 = arith.select %145, %142, %146 : vector<64x16xi1>, vector<64x16xf32>
    %148 = vector.extract_strided_slice %140 {offsets = [64, 0], sizes = [64, 16], strides = [1, 1]} : vector<128x16xf32> to vector<64x16xf32>
    %149 = arith.addf %147, %148 : vector<64x16xf32>
    %150 = vector.extract_strided_slice %16 {offsets = [256, 0], sizes = [64, 16], strides = [1, 1]} : vector<320x16xf32> to vector<64x16xf32>
    %151 = arith.addf %149, %150 : vector<64x16xf32>
    %152 = vector.extract_strided_slice %151 {offsets = [0, 0], sizes = [32, 16], strides = [1, 1]} : vector<64x16xf32> to vector<32x16xf32>
    %153 = math.tanh %152 : vector<32x16xf32>
    %154 = vector.extract_strided_slice %151 {offsets = [32, 0], sizes = [32, 16], strides = [1, 1]} : vector<64x16xf32> to vector<32x16xf32>
    %155 = arith.negf %154 : vector<32x16xf32>
    %156 = math.exp %155 : vector<32x16xf32>
    %cst_62 = arith.constant 1.000000e+00 : f32
    %157 = vector.broadcast %cst_62 : f32 to vector<32x16xf32>
    %158 = arith.addf %157, %156 : vector<32x16xf32>
    %159 = arith.divf %157, %158 : vector<32x16xf32>
    %160 = arith.mulf %153, %159 : vector<32x16xf32>
    %c4_63 = arith.constant 4 : index
    %c0_64 = arith.constant 0 : index
    %c0_65 = arith.constant 0 : index
    %161 = vector.load %arg6[%c4_63, %c0_64, %c0_65] : memref<5x64x32xf32, #tpu.memory_space<vmem>>, vector<1x64x32xf32>
    %162 = vector.shape_cast %161 : vector<1x64x32xf32> to vector<64x32xf32>
    %cst_66 = arith.constant dense<0.000000e+00> : vector<64x16xf32>
    %163 = tpu.matmul %162, %160, %cst_66 {dimension_numbers = #tpu.dot_dimension_numbers<[1], [0], [0], [1], [0, 0, 1, 1], [], []>} : vector<64x32xf32>, vector<32x16xf32>, vector<64x16xf32> -> vector<64x16xf32>
    %164 = vector.extract_strided_slice %163 {offsets = [32, 0], sizes = [32, 16], strides = [1, 1]} : vector<64x16xf32> to vector<32x16xf32>
    %165 = arith.addf %137, %164 : vector<32x16xf32>
    %c0_67 = arith.constant 0 : index
    %c0_68 = arith.constant 0 : index
    %166 = vector.load %arg7[%c0_67, %c0_68] : memref<32x4xf32, #tpu.memory_space<vmem>>, vector<32x4xf32>
    %cst_69 = arith.constant dense<0.000000e+00> : vector<32x16xf32>
    %167 = tpu.matmul %166, %3, %cst_69 {dimension_numbers = #tpu.dot_dimension_numbers<[1], [0], [0], [1], [0, 0, 1, 1], [], []>} : vector<32x4xf32>, vector<4x16xf32>, vector<32x16xf32> -> vector<32x16xf32>
    %168 = arith.addf %165, %167 : vector<32x16xf32>
    %169 = math.tanh %168 : vector<32x16xf32>
    %c0_70 = arith.constant 0 : index
    %c0_71 = arith.constant 0 : index
    %170 = vector.load %arg8[%c0_70, %c0_71] : memref<4x32xf32, #tpu.memory_space<vmem>>, vector<4x32xf32>
    %cst_72 = arith.constant dense<0.000000e+00> : vector<4x16xf32>
    %171 = tpu.matmul %170, %169, %cst_72 {dimension_numbers = #tpu.dot_dimension_numbers<[1], [0], [0], [1], [0, 0, 1, 1], [], []>} : vector<4x32xf32>, vector<32x16xf32>, vector<4x16xf32> -> vector<4x16xf32>
    %172 = arith.negf %171 : vector<4x16xf32>
    %173 = math.exp %172 : vector<4x16xf32>
    %cst_73 = arith.constant 1.000000e+00 : f32
    %174 = vector.broadcast %cst_73 : f32 to vector<4x16xf32>
    %175 = arith.addf %174, %173 : vector<4x16xf32>
    %176 = arith.divf %174, %175 : vector<4x16xf32>
    %c0_74 = arith.constant 0 : index
    %c0_75 = arith.constant 0 : index
    %c0_76 = arith.constant 0 : index
    %177 = vector.load %arg9[%c0_74, %c0_75, %c0_76] : memref<1x4x16xf32, #tpu.memory_space<vmem>>, vector<1x4x16xf32>
    %178 = vector.shape_cast %177 : vector<1x4x16xf32> to vector<4x16xf32>
    %179 = vector.shape_cast %176 : vector<4x16xf32> to vector<1x4x16xf32>
    tpu.vector_store %arg9[%c0_74, %c0_75, %c0_76], %179 {strides = array<i32>} : memref<1x4x16xf32, #tpu.memory_space<vmem>>, vector<1x4x16xf32>,
    return
  }
  func.func @transform_0(%arg0: i32) -> (i32, i32, i32) {
    %c0_i32 = arith.constant 0 : i32
    %c0_i32_0 = arith.constant 0 : i32
    %c0_i32_1 = arith.constant 0 : i32
    return %arg0, %c0_i32, %c0_i32_0 : i32, i32, i32
  }
  func.func @transform_1(%arg0: i32) -> (i32, i32, i32) {
    %c0_i32 = arith.constant 0 : i32
    %c0_i32_0 = arith.constant 0 : i32
    %c0_i32_1 = arith.constant 0 : i32
    return %arg0, %c0_i32, %c0_i32_0 : i32, i32, i32
  }
  func.func @transform_2(%arg0: i32) -> (i32, i32) {
    %c0_i32 = arith.constant 0 : i32
    %c0_i32_0 = arith.constant 0 : i32
    %c0_i32_1 = arith.constant 0 : i32
    return %c0_i32, %c0_i32_0 : i32, i32
  }
  func.func @transform_3(%arg0: i32) -> (i32, i32, i32) {
    %c0_i32 = arith.constant 0 : i32
    %c0_i32_0 = arith.constant 0 : i32
    %c0_i32_1 = arith.constant 0 : i32
    %c0_i32_2 = arith.constant 0 : i32
    return %c0_i32, %c0_i32_0, %c0_i32_1 : i32, i32, i32
  }
  func.func @transform_4(%arg0: i32) -> (i32, i32) {
    %c0_i32 = arith.constant 0 : i32
    %c0_i32_0 = arith.constant 0 : i32
    %c0_i32_1 = arith.constant 0 : i32
    return %c0_i32, %c0_i32_0 : i32, i32
  }
  func.func @transform_5(%arg0: i32) -> (i32, i32, i32) {
    %c0_i32 = arith.constant 0 : i32
    %c0_i32_0 = arith.constant 0 : i32
    %c0_i32_1 = arith.constant 0 : i32
    %c0_i32_2 = arith.constant 0 : i32
    return %c0_i32, %c0_i32_0, %c0_i32_1 : i32, i32, i32
  }
  func.func @transform_6(%arg0: i32) -> (i32, i32) {
    %c0_i32 = arith.constant 0 : i32
    %c0_i32_0 = arith.constant 0 : i32
    %c0_i32_1 = arith.constant 0 : i32
    return %c0_i32, %c0_i32_0 : i32, i32
  }
  func.func @transform_7(%arg0: i32) -> (i32, i32) {
    %c0_i32 = arith.constant 0 : i32
    %c0_i32_0 = arith.constant 0 : i32
    %c0_i32_1 = arith.constant 0 : i32
    return %c0_i32, %c0_i32_0 : i32, i32
  }
  func.func @transform_8(%arg0: i32) -> (i32, i32, i32) {
    %c0_i32 = arith.constant 0 : i32
    %c0_i32_0 = arith.constant 0 : i32
    %c0_i32_1 = arith.constant 0 : i32
    return %arg0, %c0_i32, %c0_i32_0 : i32, i32, i32
  }
}

</mosaic_0001>

<llo_original>
// kernel: tpu_custom_call.1
$region0: #{tpu_custom_call.1}
  #allocation0 [shape = 'u32[]', space=smem, size = 0x4, offset = 0x4, fixed_abs, tag = 'smem constant byte address 0x4 - core index']
  #allocation1 [shape = 'u32[72,128]{1,0:T(1,128)}', space=vmem, size = 0x9000, scoped, tag = 'internal scratch']
  %s0 = inlined_call_operand.vmem [shape: f32[2,4,16], index: 0, kind: input, shape index: {}]
  %s1 = inlined_call_operand.vmem [shape: f32[2,4,16], index: 1, kind: input, shape index: {}]
  %s2 = inlined_call_operand.vmem [shape: f32[64,4], index: 2, kind: input, shape index: {}]
  %s3 = inlined_call_operand.vmem [shape: f32[5,128,32], index: 3, kind: input, shape index: {}]
  %s4 = inlined_call_operand.vmem [shape: f32[320,4], index: 4, kind: input, shape index: {}]
  %s5 = inlined_call_operand.vmem [shape: f32[5,64,32], index: 5, kind: input, shape index: {}]
  %s6 = inlined_call_operand.vmem [shape: f32[32,4], index: 6, kind: input, shape index: {}]
  %s7 = inlined_call_operand.vmem [shape: f32[4,32], index: 7, kind: input, shape index: {}]
  %s8 = inlined_call_operand.hbm [shape: f32[2,4,16], index: 8, kind: output, shape index: {}]
  %s9 = sld [smem:[#allocation0]]
  $region65: #{tpu_custom_call.1} parent=0
    _
  %s11 = ssub.s32 1, %s9
  %s12 = scalar_select 0, %s11, %s9
  $region1: #{tpu_custom_call.1} parent=0
    #allocation2 [shape = 'u8[4096]{0}', space=vmem, size = 0x1000, scoped, tag = 'output window, operand 0']
    #allocation3 [shape = 's32[2]{0}', space=sflag, size = 0x8, scoped, tag = 'scoped memory for tpu_custom_call.1']
    %13 = vsyncpa [#allocation3], 0
    %s14 = scalar_lea.sflag [#allocation3], 1
    %15 = vsyncpa %s14, 0
    loop: start=0, step=1, limit=4
    $region2: #{tpu_custom_call.1} parent=1 // loop_pre_header
      _
    $region3: #{tpu_custom_call.1} parent=1 // loop_header
      %s17 = sphi 0, %s21
      %p18 = scmp.ge.s32.totalorder %s17, 4
      %s27 = sphi 0, %s29
      %s30 = sphi 0, %s27
      %s31 = sphi 0, %s30
      %s47 = sphi 0, %s31
      %s53 = sphi 0, %s55
      %s56 = sphi 0, %s53
      %s57 = sphi 0, %s56
      %s73 = sphi 0, %s57
      %s77 = sphi 0, %s77
      %s79 = sphi 0, %s77
      %s80 = sphi 0, %s79
      %s94 = sphi 0, %s80
      %s98 = sphi 0, %s98
      %s100 = sphi 0, %s98
      %s101 = sphi 0, %s100
      %s115 = sphi 0, %s101
      %s119 = sphi 0, %s119
      %s121 = sphi 0, %s119
      %s122 = sphi 0, %s121
      %s136 = sphi 0, %s122
      %s140 = sphi 0, %s140
      %s142 = sphi 0, %s140
      %s143 = sphi 0, %s142
      %s157 = sphi 0, %s143
      %s161 = sphi 0, %s161
      %s163 = sphi 0, %s161
      %s164 = sphi 0, %s163
      %s178 = sphi 0, %s164
      %s182 = sphi 0, %s182
      %s184 = sphi 0, %s182
      %s185 = sphi 0, %s184
      %s199 = sphi 0, %s185
      %s205 = sphi 0, %s207
      %s208 = sphi 0, %s205
      %s209 = sphi 0, %s208
      %s225 = sphi 0, %s209
    $region4: #{tpu_custom_call.1} parent=1 // loop_header_branch
      %20 = sbr.rel (%p18) target = $region8
    $region5: #{tpu_custom_call.1} parent=1 // loop_body
      %s22 = ssub.s32 %s17, 1
      %s23 = ssub.s32 %s17, 2
      %s24 = sadd.s32 %s17, 1
      %s25 = ssub.s32 %s17, %s24
      %p26 = scmp.eq.s32.totalorder %s25, 0
      %s28 = sadd.s32 %s27, 1
      %s29 = scalar_select %p26, %s27, %s28
      %p32 = pneg %p26
      %p33 = scmp.eq.s32.totalorder %s17, 1
      %p34 = por %p32, %p33
      %p35 = scmp.ne.s32.totalorder %s27, %s30
      %p36 = scmp.eq.s32.totalorder %s17, 0
      %p37 = por %p35, %p36
      %p38 = scmp.ne.s32.totalorder %s27, %s30
      %p39 = scmp.eq.s32.totalorder %s22, 1
      %p40 = por %p38, %p39
      %p41 = scmp.ne.s32.totalorder %s30, %s31
      %p42 = scmp.eq.s32.totalorder %s22, 0
      %p43 = por %p41, %p42
      %p44 = scmp.ne.s32.totalorder %s30, %s31
      %p45 = scmp.eq.s32.totalorder %s23, 1
      %p46 = por %p44, %p45
      %p48 = scmp.ne.s32.totalorder %s31, %s47
      %p49 = scmp.eq.s32.totalorder %s23, 0
      %p50 = por %p48, %p49
      %s51 = ssub.s32 %s17, %s24
      %p52 = scmp.eq.s32.totalorder %s51, 0
      %s54 = sadd.s32 %s53, 1
      %s55 = scalar_select %p52, %s53, %s54
      %p58 = pneg %p52
      %p59 = scmp.eq.s32.totalorder %s17, 1
      %p60 = por %p58, %p59
      %p61 = scmp.ne.s32.totalorder %s53, %s56
      %p62 = scmp.eq.s32.totalorder %s17, 0
      %p63 = por %p61, %p62
      %p64 = scmp.ne.s32.totalorder %s53, %s56
      %p65 = scmp.eq.s32.totalorder %s22, 1
      %p66 = por %p64, %p65
      %p67 = scmp.ne.s32.totalorder %s56, %s57
      %p68 = scmp.eq.s32.totalorder %s22, 0
      %p69 = por %p67, %p68
      %p70 = scmp.ne.s32.totalorder %s56, %s57
      %p71 = scmp.eq.s32.totalorder %s23, 1
      %p72 = por %p70, %p71
      %p74 = scmp.ne.s32.totalorder %s57, %s73
      %p75 = scmp.eq.s32.totalorder %s23, 0
      %p76 = por %p74, %p75
      %s78 = sadd.s32 %s77, 1
      %p81 = scmp.eq.s32.totalorder %s17, 1
      %p82 = scmp.ne.s32.totalorder %s77, %s79
      %p83 = scmp.eq.s32.totalorder %s17, 0
      %p84 = por %p82, %p83
      %p85 = scmp.ne.s32.totalorder %s77, %s79
      %p86 = scmp.eq.s32.totalorder %s22, 1
      %p87 = por %p85, %p86
      %p88 = scmp.ne.s32.totalorder %s79, %s80
      %p89 = scmp.eq.s32.totalorder %s22, 0
      %p90 = por %p88, %p89
      %p91 = scmp.ne.s32.totalorder %s79, %s80
      %p92 = scmp.eq.s32.totalorder %s23, 1
      %p93 = por %p91, %p92
      %p95 = scmp.ne.s32.totalorder %s80, %s94
      %p96 = scmp.eq.s32.totalorder %s23, 0
      %p97 = por %p95, %p96
      %s99 = sadd.s32 %s98, 1
      %p102 = scmp.eq.s32.totalorder %s17, 1
      %p103 = scmp.ne.s32.totalorder %s98, %s100
      %p104 = scmp.eq.s32.totalorder %s17, 0
      %p105 = por %p103, %p104
      %p106 = scmp.ne.s32.totalorder %s98, %s100
      %p107 = scmp.eq.s32.totalorder %s22, 1
      %p108 = por %p106, %p107
      %p109 = scmp.ne.s32.totalorder %s100, %s101
      %p110 = scmp.eq.s32.totalorder %s22, 0
      %p111 = por %p109, %p110
      %p112 = scmp.ne.s32.totalorder %s100, %s101
      %p113 = scmp.eq.s32.totalorder %s23, 1
      %p114 = por %p112, %p113
      %p116 = scmp.ne.s32.totalorder %s101, %s115
      %p117 = scmp.eq.s32.totalorder %s23, 0
      %p118 = por %p116, %p117
      %s120 = sadd.s32 %s119, 1
      %p123 = scmp.eq.s32.totalorder %s17, 1
      %p124 = scmp.ne.s32.totalorder %s119, %s121
      %p125 = scmp.eq.s32.totalorder %s17, 0
      %p126 = por %p124, %p125
      %p127 = scmp.ne.s32.totalorder %s119, %s121
      %p128 = scmp.eq.s32.totalorder %s22, 1
      %p129 = por %p127, %p128
      %p130 = scmp.ne.s32.totalorder %s121, %s122
      %p131 = scmp.eq.s32.totalorder %s22, 0
      %p132 = por %p130, %p131
      %p133 = scmp.ne.s32.totalorder %s121, %s122
      %p134 = scmp.eq.s32.totalorder %s23, 1
      %p135 = por %p133, %p134
      %p137 = scmp.ne.s32.totalorder %s122, %s136
      %p138 = scmp.eq.s32.totalorder %s23, 0
      %p139 = por %p137, %p138
      %s141 = sadd.s32 %s140, 1
      %p144 = scmp.eq.s32.totalorder %s17, 1
      %p145 = scmp.ne.s32.totalorder %s140, %s142
      %p146 = scmp.eq.s32.totalorder %s17, 0
      %p147 = por %p145, %p146
      %p148 = scmp.ne.s32.totalorder %s140, %s142
      %p149 = scmp.eq.s32.totalorder %s22, 1
      %p150 = por %p148, %p149
      %p151 = scmp.ne.s32.totalorder %s142, %s143
      %p152 = scmp.eq.s32.totalorder %s22, 0
      %p153 = por %p151, %p152
      %p154 = scmp.ne.s32.totalorder %s142, %s143
      %p155 = scmp.eq.s32.totalorder %s23, 1
      %p156 = por %p154, %p155
      %p158 = scmp.ne.s32.totalorder %s143, %s157
      %p159 = scmp.eq.s32.totalorder %s23, 0
      %p160 = por %p158, %p159
      %s162 = sadd.s32 %s161, 1
      %p165 = scmp.eq.s32.totalorder %s17, 1
      %p166 = scmp.ne.s32.totalorder %s161, %s163
      %p167 = scmp.eq.s32.totalorder %s17, 0
      %p168 = por %p166, %p167
      %p169 = scmp.ne.s32.totalorder %s161, %s163
      %p170 = scmp.eq.s32.totalorder %s22, 1
      %p171 = por %p169, %p170
      %p172 = scmp.ne.s32.totalorder %s163, %s164
      %p173 = scmp.eq.s32.totalorder %s22, 0
      %p174 = por %p172, %p173
      %p175 = scmp.ne.s32.totalorder %s163, %s164
      %p176 = scmp.eq.s32.totalorder %s23, 1
      %p177 = por %p175, %p176
      %p179 = scmp.ne.s32.totalorder %s164, %s178
      %p180 = scmp.eq.s32.totalorder %s23, 0
      %p181 = por %p179, %p180
      %s183 = sadd.s32 %s182, 1
      %p186 = scmp.eq.s32.totalorder %s17, 1
      %p187 = scmp.ne.s32.totalorder %s182, %s184
      %p188 = scmp.eq.s32.totalorder %s17, 0
      %p189 = por %p187, %p188
      %p190 = scmp.ne.s32.totalorder %s182, %s184
      %p191 = scmp.eq.s32.totalorder %s22, 1
      %p192 = por %p190, %p191
      %p193 = scmp.ne.s32.totalorder %s184, %s185
      %p194 = scmp.eq.s32.totalorder %s22, 0
      %p195 = por %p193, %p194
      %p196 = scmp.ne.s32.totalorder %s184, %s185
      %p197 = scmp.eq.s32.totalorder %s23, 1
      %p198 = por %p196, %p197
      %p200 = scmp.ne.s32.totalorder %s185, %s199
      %p201 = scmp.eq.s32.totalorder %s23, 0
      %p202 = por %p200, %p201
      %s203 = ssub.s32 %s17, %s24
      %p204 = scmp.eq.s32.totalorder %s203, 0
      %s206 = sadd.s32 %s205, 1
      %s207 = scalar_select %p204, %s205, %s206
      %p210 = pneg %p204
      %p211 = scmp.eq.s32.totalorder %s17, 1
      %p212 = por %p210, %p211
      %p213 = scmp.ne.s32.totalorder %s205, %s208
      %p214 = scmp.eq.s32.totalorder %s17, 0
      %p215 = por %p213, %p214
      %p216 = scmp.ne.s32.totalorder %s205, %s208
      %p217 = scmp.eq.s32.totalorder %s22, 1
      %p218 = por %p216, %p217
      %p219 = scmp.ne.s32.totalorder %s208, %s209
      %p220 = scmp.eq.s32.totalorder %s22, 0
      %p221 = por %p219, %p220
      %p222 = scmp.ne.s32.totalorder %s208, %s209
      %p223 = scmp.eq.s32.totalorder %s23, 1
      %p224 = por %p222, %p223
      %p226 = scmp.ne.s32.totalorder %s209, %s225
      %p227 = scmp.eq.s32.totalorder %s23, 0
      %p228 = por %p226, %p227
      %p229 = scmp.le.s32.totalorder 1, %s17
      %p230 = scmp.lt.s32.totalorder %s17, 3
      %p231 = pnand %p229, %p230
      %p232 = pneg %p231
      // Predicated region
      $region9: #{tpu_custom_call.1} parent=5 // pred_check
        _
      $region10: #{tpu_custom_call.1} parent=5 // pred_check_branch
        %234 = sbr.rel (%p231) target = $region12
      $region11: #{tpu_custom_call.1} parent=5 // pred_region
        %s235 = ssub.s32 %s17, 1
        // Predicated region
        $region13: #{tpu_custom_call.1} parent=11 // pred_check
          %p236 = pneg %p90
        $region14: #{tpu_custom_call.1} parent=11 // pred_check_branch
          %238 = sbr.rel (%p236) target = $region16
        $region15: #{tpu_custom_call.1} parent=11 // pred_region
          _
        $region16: #{tpu_custom_call.1} parent=11 // pred_fallthru
          _
        // Predicated region
        $region17: #{tpu_custom_call.1} parent=11 // pred_check
          %p239 = pneg %p111
        $region18: #{tpu_custom_call.1} parent=11 // pred_check_branch
          %241 = sbr.rel (%p239) target = $region20
        $region19: #{tpu_custom_call.1} parent=11 // pred_region
          _
        $region20: #{tpu_custom_call.1} parent=11 // pred_fallthru
          _
        // Predicated region
        $region21: #{tpu_custom_call.1} parent=11 // pred_check
          %p242 = pneg %p132
        $region22: #{tpu_custom_call.1} parent=11 // pred_check_branch
          %244 = sbr.rel (%p242) target = $region24
        $region23: #{tpu_custom_call.1} parent=11 // pred_region
          _
        $region24: #{tpu_custom_call.1} parent=11 // pred_fallthru
          _
        // Predicated region
        $region25: #{tpu_custom_call.1} parent=11 // pred_check
          %p245 = pneg %p153
        $region26: #{tpu_custom_call.1} parent=11 // pred_check_branch
          %247 = sbr.rel (%p245) target = $region28
        $region27: #{tpu_custom_call.1} parent=11 // pred_region
          _
        $region28: #{tpu_custom_call.1} parent=11 // pred_fallthru
          _
        // Predicated region
        $region29: #{tpu_custom_call.1} parent=11 // pred_check
          %p248 = pneg %p174
        $region30: #{tpu_custom_call.1} parent=11 // pred_check_branch
          %250 = sbr.rel (%p248) target = $region32
        $region31: #{tpu_custom_call.1} parent=11 // pred_region
          _
        $region32: #{tpu_custom_call.1} parent=11 // pred_fallthru
          _
        // Predicated region
        $region33: #{tpu_custom_call.1} parent=11 // pred_check
          %p251 = pneg %p195
        $region34: #{tpu_custom_call.1} parent=11 // pred_check_branch
          %253 = sbr.rel (%p251) target = $region36
        $region35: #{tpu_custom_call.1} parent=11 // pred_region
          _
        $region36: #{tpu_custom_call.1} parent=11 // pred_fallthru
          _
      $region12: #{tpu_custom_call.1} parent=5 // pred_fallthru
        _
      %p254 = scmp.lt.s32.totalorder %s17, 2
      // Predicated region
      $region37: #{tpu_custom_call.1} parent=5 // pred_check
        %p255 = pneg %p254
      $region38: #{tpu_custom_call.1} parent=5 // pred_check_branch
        %257 = sbr.rel (%p255) target = $region40
      $region39: #{tpu_custom_call.1} parent=5 // pred_region
        // Predicated region
        $region41: #{tpu_custom_call.1} parent=39 // pred_check
          %p258 = pneg %p37
        $region42: #{tpu_custom_call.1} parent=39 // pred_check_branch
          %260 = sbr.rel (%p258) target = $region44
        $region43: #{tpu_custom_call.1} parent=39 // pred_region
          %p261 = scmp.lt.s32.totalorder %s17, 1
          %s262 = scalar_select %p261, %s17, 1
          %s263 = smul.addr %s262, 4
          %s264 = scalar_lea.vmem %s0, %s263
        $region44: #{tpu_custom_call.1} parent=39 // pred_fallthru
          _
        // Predicated region
        $region45: #{tpu_custom_call.1} parent=39 // pred_check
          %p265 = pneg %p63
        $region46: #{tpu_custom_call.1} parent=39 // pred_check_branch
          %267 = sbr.rel (%p265) target = $region48
        $region47: #{tpu_custom_call.1} parent=39 // pred_region
          %p268 = scmp.lt.s32.totalorder %s17, 1
          %s269 = scalar_select %p268, %s17, 1
          %s270 = smul.addr %s269, 4
          %s271 = scalar_lea.vmem %s1, %s270
        $region48: #{tpu_custom_call.1} parent=39 // pred_fallthru
          _
      $region40: #{tpu_custom_call.1} parent=5 // pred_fallthru
        _
      %p272 = scmp.le.s32.totalorder 1, %s17
      %p273 = scmp.lt.s32.totalorder %s17, 3
      %p274 = pnand %p272, %p273
      %p275 = pneg %p274
      // Predicated region
      $region49: #{tpu_custom_call.1} parent=5 // pred_check
        _
      $region50: #{tpu_custom_call.1} parent=5 // pred_check_branch
        %277 = sbr.rel (%p274) target = $region52
      $region51: #{tpu_custom_call.1} parent=5 // pred_region
        %s278 = ssub.s32 %s17, 1
        %p279 = scmp.lt.s32.totalorder %s22, 1
        %s280 = scalar_select %p279, %s22, 1
        %s281 = smul.addr %s280, 4
        %s282 = scalar_lea.vmem %s0, %s281
        %p283 = pneg %p43
        %p284 = pneg %p40
        %p285 = scmp.lt.s32.totalorder %s22, 1
        %s286 = scalar_select %p285, %s22, 1
        %s287 = smul.addr %s286, 4
        %s288 = scalar_lea.vmem %s1, %s287
        %p289 = pneg %p69
        %p290 = pneg %p66
        %p291 = pneg %p90
        %p292 = pneg %p87
        %p293 = pneg %p111
        %p294 = pneg %p108
        %p295 = pneg %p132
        %p296 = pneg %p129
        %p297 = pneg %p153
        %p298 = pneg %p150
        %p299 = pneg %p174
        %p300 = pneg %p171
        %p301 = pneg %p195
        %p302 = pneg %p192
        %p303 = pneg %p221
        %p304 = pneg %p218
        %s305 = sand.u32 %s208, 1
        %s306 = scalar_lea.sflag [#allocation3], %s305
        %s307 = sand.u32 %s208, 1
        %s308 = smul.addr %s307, 4
        %s309 = scalar_lea.vmem [#allocation2], %s308
        %p310 = scmp.lt.s32.totalorder %s22, 1
        %s311 = scalar_select %p310, %s22, 1
        %s312 = smul.addr %s311, 4
        %s313 = scalar_lea.vmem %s0, %s312
        %p314 = scmp.lt.s32.totalorder %s22, 1
        %s315 = scalar_select %p314, %s22, 1
        %s316 = smul.addr %s315, 4
        %s317 = scalar_lea.vmem %s1, %s316
        %v318 = vld [vmem:[%s313] sm:$0xf]
        %v319 = vld [vmem:[%s317] sm:$0xf]
        %v320 = vld [vmem:[%s2] sm:$0xff]
        %v321 = vld [vmem:[%s2 + $0x8] sm:$0xff]
        %v322 = vld [vmem:[%s2 + $0x10] sm:$0xff]
        %v323 = vld [vmem:[%s2 + $0x18] sm:$0xff]
        %v324 = vld [vmem:[%s2 + $0x20] sm:$0xff]
        %v325 = vld [vmem:[%s2 + $0x28] sm:$0xff]
        %v326 = vld [vmem:[%s2 + $0x30] sm:$0xff]
        %v327 = vld [vmem:[%s2 + $0x38] sm:$0xff]
        %vm328 = vcmask 31744
        %v330 = vsel %vm328, %v320, 0
        %v333 = vsel %vm328, %v321, 0
        %v336 = vsel %vm328, %v322, 0
        %v339 = vsel %vm328, %v323, 0
        %v342 = vsel %vm328, %v324, 0
        %v345 = vsel %vm328, %v325, 0
        %v348 = vsel %vm328, %v326, 0
        %v351 = vsel %vm328, %v327, 0
        %vm353 = vcmask 1043456
        %v355 = vsel %vm353, %v318, 0
        %357 = vmatpush.msra.mxu0 0.0
        %358 = vmatpush.msra.mxu0 0.0
        %359 = vmatpush.msra.mxu0 0.0
        %360 = vmatpush.msra.mxu0 0.0
        %361 = vmatpush.msra.mxu0 0.0
        %362 = vmatpush.msra.mxu0 0.0
        %363 = vmatpush.msra.mxu0 0.0
        %364 = vmatpush.msra.mxu0 0.0
        %365 = vmatpush.msra.mxu0 0.0
        %366 = vmatpush.msra.mxu0 0.0
        %367 = vmatpush.msra.mxu0 0.0
        %368 = vmatpush.msra.mxu0 0.0
        %369 = vmatpush.msra.mxu0 0.0
        %370 = vmatpush.msra.mxu0 0.0
        %371 = vmatpush.msra.mxu0 0.0
        %372 = vmatpush.msra.mxu0 %v355
        %373 = vmatmul.f32.gmra.mxu0 %v330
        %v374 = vpop.f32.mrf.mxu0
        %v375 = vadd.f32 0.0, %v374
        %376 = vmatmul.f32.gmra.mxu0 %v333
        %v377 = vpop.f32.mrf.mxu0
        %v378 = vadd.f32 0.0, %v377
        %379 = vmatmul.f32.gmra.mxu0 %v336
        %v380 = vpop.f32.mrf.mxu0
        %v381 = vadd.f32 0.0, %v380
        %382 = vmatmul.f32.gmra.mxu0 %v339
        %v383 = vpop.f32.mrf.mxu0
        %v384 = vadd.f32 0.0, %v383
        %385 = vmatmul.f32.gmra.mxu0 %v342
        %v386 = vpop.f32.mrf.mxu0
        %v387 = vadd.f32 0.0, %v386
        %388 = vmatmul.f32.gmra.mxu0 %v345
        %v389 = vpop.f32.mrf.mxu0
        %v390 = vadd.f32 0.0, %v389
        %391 = vmatmul.f32.gmra.mxu0 %v348
        %v392 = vpop.f32.mrf.mxu0
        %v393 = vadd.f32 0.0, %v392
        %394 = vmatmul.f32.gmra.mxu0 %v351
        %v395 = vpop.f32.mrf.mxu0
        %v396 = vadd.f32 0.0, %v395
        %397 = vdwg.mxu0
        %vm398 = vcmask 1047680
        %399 = vrot.lane.b32.xlu0 %v375, 16
        %v400 = vpop.permute.xlu0 %399
        %v401 = vsel %vm398, %v400, %v375
        %402 = vrot.lane.b32.xlu0 %v378, 16
        %v403 = vpop.permute.xlu0 %402
        %v404 = vsel %vm398, %v403, %v378
        %405 = vrot.lane.b32.xlu0 %v381, 16
        %v406 = vpop.permute.xlu0 %405
        %v407 = vsel %vm398, %v406, %v381
        %408 = vrot.lane.b32.xlu0 %v384, 16
        %v409 = vpop.permute.xlu0 %408
        %v410 = vsel %vm398, %v409, %v384
        %411 = vrot.lane.b32.xlu0 %v401, 16
        %v412 = vpop.permute.xlu0 %411
        %413 = vrot.lane.b32.xlu0 %v404, 16
        %v414 = vpop.permute.xlu0 %413
        %415 = vrot.lane.b32.xlu0 %v407, 16
        %v416 = vpop.permute.xlu0 %415
        %417 = vrot.lane.b32.xlu0 %v410, 16
        %v418 = vpop.permute.xlu0 %417
        %v419 = vsel %vm398, %v412, %v375
        %v420 = vsel %vm398, %v414, %v378
        %v421 = vsel %vm398, %v416, %v381
        %v422 = vsel %vm398, %v418, %v384
        %v423 = vlaneseq
        %v424 = vand.u32 %v423, 127
        %vm425 = vcmp.ge.s32.totalorder %v424, 1
        %430 = vrot.lane.b32.xlu0 %v419, 113
        %v431 = vpop.permute.xlu0 %430
        %432 = vrot.lane.b32.xlu0 %v420, 113
        %v433 = vpop.permute.xlu0 %432
        %434 = vrot.lane.b32.xlu0 %v421, 113
        %v435 = vpop.permute.xlu0 %434
        %436 = vrot.lane.b32.xlu0 %v422, 113
        %v437 = vpop.permute.xlu0 %436
        %v442 = vsel %vm425, %v431, 0.0
        %v443 = vsel %vm425, %v433, 0.0
        %v444 = vsel %vm425, %v435, 0.0
        %v445 = vsel %vm425, %v437, 0.0
        %v446 = vadd.f32 %v442, %v387
        %v447 = vadd.f32 %v443, %v390
        %v448 = vadd.f32 %v444, %v393
        %v449 = vadd.f32 %v445, %v396
        %v450 = vld [vmem:[%s4] sm:$0xff]
        %v451 = vld [vmem:[%s4 + $0x8] sm:$0xff]
        %v452 = vld [vmem:[%s4 + $0x10] sm:$0xff]
        %v453 = vld [vmem:[%s4 + $0x18] sm:$0xff]
        %v454 = vld [vmem:[%s4 + $0x20] sm:$0xff]
        %v455 = vld [vmem:[%s4 + $0x28] sm:$0xff]
        %v456 = vld [vmem:[%s4 + $0x30] sm:$0xff]
        %v457 = vld [vmem:[%s4 + $0x38] sm:$0xff]
        %v458 = vld [vmem:[%s4 + $0x40] sm:$0xff]
        %v459 = vld [vmem:[%s4 + $0x48] sm:$0xff]
        %v460 = vld [vmem:[%s4 + $0x50] sm:$0xff]
        %v461 = vld [vmem:[%s4 + $0x58] sm:$0xff]
        %v462 = vld [vmem:[%s4 + $0x60] sm:$0xff]
        %v463 = vld [vmem:[%s4 + $0x68] sm:$0xff]
        %v464 = vld [vmem:[%s4 + $0x70] sm:$0xff]
        %v465 = vld [vmem:[%s4 + $0x78] sm:$0xff]
        %v466 = vld [vmem:[%s4 + $0x80] sm:$0xff]
        %v467 = vld [vmem:[%s4 + $0x88] sm:$0xff]
        %v468 = vld [vmem:[%s4 + $0x90] sm:$0xff]
        %v469 = vld [vmem:[%s4 + $0x98] sm:$0xff]
        %v470 = vld [vmem:[%s4 + $0xa0] sm:$0xff]
        %v471 = vld [vmem:[%s4 + $0xa8] sm:$0xff]
        %v472 = vld [vmem:[%s4 + $0xb0] sm:$0xff]
        %v473 = vld [vmem:[%s4 + $0xb8] sm:$0xff]
        %v474 = vld [vmem:[%s4 + $0xc0] sm:$0xff]
        %v475 = vld [vmem:[%s4 + $0xc8] sm:$0xff]
        %v476 = vld [vmem:[%s4 + $0xd0] sm:$0xff]
        %v477 = vld [vmem:[%s4 + $0xd8] sm:$0xff]
        %v478 = vld [vmem:[%s4 + $0xe0] sm:$0xff]
        %v479 = vld [vmem:[%s4 + $0xe8] sm:$0xff]
        %v480 = vld [vmem:[%s4 + $0xf0] sm:$0xff]
        %v481 = vld [vmem:[%s4 + $0xf8] sm:$0xff]
        %v482 = vld [vmem:[%s4 + $0x100] sm:$0xff]
        %v483 = vld [vmem:[%s4 + $0x108] sm:$0xff]
        %v484 = vld [vmem:[%s4 + $0x110] sm:$0xff]
        %v485 = vld [vmem:[%s4 + $0x118] sm:$0xff]
        %v486 = vld [vmem:[%s4 + $0x120] sm:$0xff]
        %v487 = vld [vmem:[%s4 + $0x128] sm:$0xff]
        %v488 = vld [vmem:[%s4 + $0x130] sm:$0xff]
        %v489 = vld [vmem:[%s4 + $0x138] sm:$0xff]
        %v491 = vsel %vm328, %v450, 0
        %v494 = vsel %vm328, %v451, 0
        %v497 = vsel %vm328, %v452, 0
        %v500 = vsel %vm328, %v453, 0
        %v503 = vsel %vm328, %v454, 0
        %v506 = vsel %vm328, %v455, 0
        %v509 = vsel %vm328, %v456, 0
        %v512 = vsel %vm328, %v457, 0
        %v515 = vsel %vm328, %v458, 0
        %v518 = vsel %vm328, %v459, 0
        %v521 = vsel %vm328, %v460, 0
        %v524 = vsel %vm328, %v461, 0
        %v527 = vsel %vm328, %v462, 0
        %v530 = vsel %vm328, %v463, 0
        %v533 = vsel %vm328, %v464, 0
        %v536 = vsel %vm328, %v465, 0
        %v539 = vsel %vm328, %v466, 0
        %v542 = vsel %vm328, %v467, 0
        %v545 = vsel %vm328, %v468, 0
        %v548 = vsel %vm328, %v469, 0
        %v551 = vsel %vm328, %v470, 0
        %v554 = vsel %vm328, %v471, 0
        %v557 = vsel %vm328, %v472, 0
        %v560 = vsel %vm328, %v473, 0
        %v563 = vsel %vm328, %v474, 0
        %v566 = vsel %vm328, %v475, 0
        %v569 = vsel %vm328, %v476, 0
        %v572 = vsel %vm328, %v477, 0
        %v575 = vsel %vm328, %v478, 0
        %v578 = vsel %vm328, %v479, 0
        %v581 = vsel %vm328, %v480, 0
        %v584 = vsel %vm328, %v481, 0
        %v587 = vsel %vm328, %v482, 0
        %v590 = vsel %vm328, %v483, 0
        %v593 = vsel %vm328, %v484, 0
        %v596 = vsel %vm328, %v485, 0
        %v599 = vsel %vm328, %v486, 0
        %v602 = vsel %vm328, %v487, 0
        %v605 = vsel %vm328, %v488, 0
        %v608 = vsel %vm328, %v489, 0
        %v611 = vsel %vm353, %v319, 0
        %613 = vmatpush.msra.mxu0 0.0
        %614 = vmatpush.msra.mxu0 0.0
        %615 = vmatpush.msra.mxu0 0.0
        %616 = vmatpush.msra.mxu0 0.0
        %617 = vmatpush.msra.mxu0 0.0
        %618 = vmatpush.msra.mxu0 0.0
        %619 = vmatpush.msra.mxu0 0.0
        %620 = vmatpush.msra.mxu0 0.0
        %621 = vmatpush.msra.mxu0 0.0
        %622 = vmatpush.msra.mxu0 0.0
        %623 = vmatpush.msra.mxu0 0.0
        %624 = vmatpush.msra.mxu0 0.0
        %625 = vmatpush.msra.mxu0 0.0
        %626 = vmatpush.msra.mxu0 0.0
        %627 = vmatpush.msra.mxu0 0.0
        %628 = vmatpush.msra.mxu0 %v611
        %629 = vmatmul.f32.gmra.mxu0 %v491
        %v630 = vpop.f32.mrf.mxu0
        %v631 = vadd.f32 0.0, %v630
        %632 = vmatmul.f32.gmra.mxu0 %v494
        %v633 = vpop.f32.mrf.mxu0
        %v634 = vadd.f32 0.0, %v633
        %635 = vmatmul.f32.gmra.mxu0 %v497
        %v636 = vpop.f32.mrf.mxu0
        %v637 = vadd.f32 0.0, %v636
        %638 = vmatmul.f32.gmra.mxu0 %v500
        %v639 = vpop.f32.mrf.mxu0
        %v640 = vadd.f32 0.0, %v639
        %641 = vmatmul.f32.gmra.mxu0 %v503
        %v642 = vpop.f32.mrf.mxu0
        %v643 = vadd.f32 0.0, %v642
        %644 = vmatmul.f32.gmra.mxu0 %v506
        %v645 = vpop.f32.mrf.mxu0
        %v646 = vadd.f32 0.0, %v645
        %647 = vmatmul.f32.gmra.mxu0 %v509
        %v648 = vpop.f32.mrf.mxu0
        %v649 = vadd.f32 0.0, %v648
        %650 = vmatmul.f32.gmra.mxu0 %v512
        %v651 = vpop.f32.mrf.mxu0
        %v652 = vadd.f32 0.0, %v651
        %653 = vmatmul.f32.gmra.mxu0 %v515
        %v654 = vpop.f32.mrf.mxu0
        %v655 = vadd.f32 0.0, %v654
        %656 = vmatmul.f32.gmra.mxu0 %v518
        %v657 = vpop.f32.mrf.mxu0
        %v658 = vadd.f32 0.0, %v657
        %659 = vmatmul.f32.gmra.mxu0 %v521
        %v660 = vpop.f32.mrf.mxu0
        %v661 = vadd.f32 0.0, %v660
        %662 = vmatmul.f32.gmra.mxu0 %v524
        %v663 = vpop.f32.mrf.mxu0
        %v664 = vadd.f32 0.0, %v663
        %665 = vmatmul.f32.gmra.mxu0 %v527
        %v666 = vpop.f32.mrf.mxu0
        %v667 = vadd.f32 0.0, %v666
        %668 = vmatmul.f32.gmra.mxu0 %v530
        %v669 = vpop.f32.mrf.mxu0
        %v670 = vadd.f32 0.0, %v669
        %671 = vmatmul.f32.gmra.mxu0 %v533
        %v672 = vpop.f32.mrf.mxu0
        %v673 = vadd.f32 0.0, %v672
        %674 = vmatmul.f32.gmra.mxu0 %v536
        %v675 = vpop.f32.mrf.mxu0
        %v676 = vadd.f32 0.0, %v675
        %677 = vmatmul.f32.gmra.mxu0 %v539
        %v678 = vpop.f32.mrf.mxu0
        %v679 = vadd.f32 0.0, %v678
        %680 = vmatmul.f32.gmra.mxu0 %v542
        %v681 = vpop.f32.mrf.mxu0
        %v682 = vadd.f32 0.0, %v681
        %683 = vmatmul.f32.gmra.mxu0 %v545
        %v684 = vpop.f32.mrf.mxu0
        %v685 = vadd.f32 0.0, %v684
        %686 = vmatmul.f32.gmra.mxu0 %v548
        %v687 = vpop.f32.mrf.mxu0
        %v688 = vadd.f32 0.0, %v687
        %689 = vmatmul.f32.gmra.mxu0 %v551
        %v690 = vpop.f32.mrf.mxu0
        %v691 = vadd.f32 0.0, %v690
        %692 = vmatmul.f32.gmra.mxu0 %v554
        %v693 = vpop.f32.mrf.mxu0
        %v694 = vadd.f32 0.0, %v693
        %695 = vmatmul.f32.gmra.mxu0 %v557
        %v696 = vpop.f32.mrf.mxu0
        %v697 = vadd.f32 0.0, %v696
        %698 = vmatmul.f32.gmra.mxu0 %v560
        %v699 = vpop.f32.mrf.mxu0
        %v700 = vadd.f32 0.0, %v699
        %701 = vmatmul.f32.gmra.mxu0 %v563
        %v702 = vpop.f32.mrf.mxu0
        %v703 = vadd.f32 0.0, %v702
        %704 = vmatmul.f32.gmra.mxu0 %v566
        %v705 = vpop.f32.mrf.mxu0
        %v706 = vadd.f32 0.0, %v705
        %707 = vmatmul.f32.gmra.mxu0 %v569
        %v708 = vpop.f32.mrf.mxu0
        %v709 = vadd.f32 0.0, %v708
        %710 = vmatmul.f32.gmra.mxu0 %v572
        %v711 = vpop.f32.mrf.mxu0
        %v712 = vadd.f32 0.0, %v711
        %713 = vmatmul.f32.gmra.mxu0 %v575
        %v714 = vpop.f32.mrf.mxu0
        %v715 = vadd.f32 0.0, %v714
        %716 = vmatmul.f32.gmra.mxu0 %v578
        %v717 = vpop.f32.mrf.mxu0
        %v718 = vadd.f32 0.0, %v717
        %719 = vmatmul.f32.gmra.mxu0 %v581
        %v720 = vpop.f32.mrf.mxu0
        %v721 = vadd.f32 0.0, %v720
        %722 = vmatmul.f32.gmra.mxu0 %v584
        %v723 = vpop.f32.mrf.mxu0
        %v724 = vadd.f32 0.0, %v723
        %725 = vmatmul.f32.gmra.mxu0 %v587
        %v726 = vpop.f32.mrf.mxu0
        %v727 = vadd.f32 0.0, %v726
        %728 = vmatmul.f32.gmra.mxu0 %v590
        %v729 = vpop.f32.mrf.mxu0
        %v730 = vadd.f32 0.0, %v729
        %731 = vmatmul.f32.gmra.mxu0 %v593
        %v732 = vpop.f32.mrf.mxu0
        %v733 = vadd.f32 0.0, %v732
        %734 = vmatmul.f32.gmra.mxu0 %v596
        %v735 = vpop.f32.mrf.mxu0
        %v736 = vadd.f32 0.0, %v735
        %737 = vmatmul.f32.gmra.mxu0 %v599
        %v738 = vpop.f32.mrf.mxu0
        %v739 = vadd.f32 0.0, %v738
        %740 = vmatmul.f32.gmra.mxu0 %v602
        %v741 = vpop.f32.mrf.mxu0
        %v742 = vadd.f32 0.0, %v741
        %743 = vmatmul.f32.gmra.mxu0 %v605
        %v744 = vpop.f32.mrf.mxu0
        %v745 = vadd.f32 0.0, %v744
        %746 = vmatmul.f32.gmra.mxu0 %v608
        %v747 = vpop.f32.mrf.mxu0
        %v748 = vadd.f32 0.0, %v747
        %749 = vdwg.mxu0
        %v750 = vld [vmem:[%s3] sm:$0xff]
        %v751 = vld [vmem:[%s3 + $0x8] sm:$0xff]
        %v752 = vld [vmem:[%s3 + $0x10] sm:$0xff]
        %v753 = vld [vmem:[%s3 + $0x18] sm:$0xff]
        %v754 = vld [vmem:[%s3 + $0x20] sm:$0xff]
        %v755 = vld [vmem:[%s3 + $0x28] sm:$0xff]
        %v756 = vld [vmem:[%s3 + $0x30] sm:$0xff]
        %v757 = vld [vmem:[%s3 + $0x38] sm:$0xff]
        %v758 = vld [vmem:[%s3 + $0x40] sm:$0xff]
        %v759 = vld [vmem:[%s3 + $0x48] sm:$0xff]
        %v760 = vld [vmem:[%s3 + $0x50] sm:$0xff]
        %v761 = vld [vmem:[%s3 + $0x58] sm:$0xff]
        %v762 = vld [vmem:[%s3 + $0x60] sm:$0xff]
        %v763 = vld [vmem:[%s3 + $0x68] sm:$0xff]
        %v764 = vld [vmem:[%s3 + $0x70] sm:$0xff]
        %v765 = vld [vmem:[%s3 + $0x78] sm:$0xff]
        %vm766 = vcmask 261120
        %v768 = vsel %vm766, %v750, 0
        %v771 = vsel %vm766, %v751, 0
        %v774 = vsel %vm766, %v752, 0
        %v777 = vsel %vm766, %v753, 0
        %v780 = vsel %vm766, %v754, 0
        %v783 = vsel %vm766, %v755, 0
        %v786 = vsel %vm766, %v756, 0
        %v789 = vsel %vm766, %v757, 0
        %v792 = vsel %vm766, %v758, 0
        %v795 = vsel %vm766, %v759, 0
        %v798 = vsel %vm766, %v760, 0
        %v801 = vsel %vm766, %v761, 0
        %v804 = vsel %vm766, %v762, 0
        %v807 = vsel %vm766, %v763, 0
        %v810 = vsel %vm766, %v764, 0
        %v813 = vsel %vm766, %v765, 0
        %815 = vmatpush.msra.mxu0 0.0
        %816 = vmatpush.msra.mxu0 0.0
        %817 = vmatpush.msra.mxu0 0.0
        %818 = vmatpush.msra.mxu0 0.0
        %819 = vmatpush.msra.mxu0 0.0
        %820 = vmatpush.msra.mxu0 0.0
        %821 = vmatpush.msra.mxu0 0.0
        %822 = vmatpush.msra.mxu0 0.0
        %823 = vmatpush.msra.mxu0 0.0
        %824 = vmatpush.msra.mxu0 0.0
        %825 = vmatpush.msra.mxu0 0.0
        %826 = vmatpush.msra.mxu0 0.0
        %827 = vmatpush.msra.mxu0 %v449
        %828 = vmatpush.msra.mxu0 %v448
        %829 = vmatpush.msra.mxu0 %v447
        %830 = vmatpush.msra.mxu0 %v446
        %831 = vmatmul.f32.gmra.mxu0 %v768
        %v832 = vpop.f32.mrf.mxu0
        %v833 = vadd.f32 0.0, %v832
        %834 = vmatmul.f32.gmra.mxu0 %v771
        %v835 = vpop.f32.mrf.mxu0
        %v836 = vadd.f32 0.0, %v835
        %837 = vmatmul.f32.gmra.mxu0 %v774
        %v838 = vpop.f32.mrf.mxu0
        %v839 = vadd.f32 0.0, %v838
        %840 = vmatmul.f32.gmra.mxu0 %v777
        %v841 = vpop.f32.mrf.mxu0
        %v842 = vadd.f32 0.0, %v841
        %843 = vmatmul.f32.gmra.mxu0 %v780
        %v844 = vpop.f32.mrf.mxu0
        %v845 = vadd.f32 0.0, %v844
        %846 = vmatmul.f32.gmra.mxu0 %v783
        %v847 = vpop.f32.mrf.mxu0
        %v848 = vadd.f32 0.0, %v847
        %849 = vmatmul.f32.gmra.mxu0 %v786
        %v850 = vpop.f32.mrf.mxu0
        %v851 = vadd.f32 0.0, %v850
        %852 = vmatmul.f32.gmra.mxu0 %v789
        %v853 = vpop.f32.mrf.mxu0
        %v854 = vadd.f32 0.0, %v853
        %855 = vmatmul.f32.gmra.mxu0 %v792
        %v856 = vpop.f32.mrf.mxu0
        %v857 = vadd.f32 0.0, %v856
        %858 = vmatmul.f32.gmra.mxu0 %v795
        %v859 = vpop.f32.mrf.mxu0
        %v860 = vadd.f32 0.0, %v859
        %861 = vmatmul.f32.gmra.mxu0 %v798
        %v862 = vpop.f32.mrf.mxu0
        %v863 = vadd.f32 0.0, %v862
        %864 = vmatmul.f32.gmra.mxu0 %v801
        %v865 = vpop.f32.mrf.mxu0
        %v866 = vadd.f32 0.0, %v865
        %867 = vmatmul.f32.gmra.mxu0 %v804
        %v868 = vpop.f32.mrf.mxu0
        %v869 = vadd.f32 0.0, %v868
        %870 = vmatmul.f32.gmra.mxu0 %v807
        %v871 = vpop.f32.mrf.mxu0
        %v872 = vadd.f32 0.0, %v871
        %873 = vmatmul.f32.gmra.mxu0 %v810
        %v874 = vpop.f32.mrf.mxu0
        %v875 = vadd.f32 0.0, %v874
        %876 = vmatmul.f32.gmra.mxu0 %v813
        %v877 = vpop.f32.mrf.mxu0
        %v878 = vadd.f32 0.0, %v877
        %879 = vdwg.mxu0
        %880 = vrot.lane.b32.xlu0 %v833, 16
        %v881 = vpop.permute.xlu0 %880
        %v882 = vsel %vm398, %v881, %v833
        %883 = vrot.lane.b32.xlu0 %v836, 16
        %v884 = vpop.permute.xlu0 %883
        %v885 = vsel %vm398, %v884, %v836
        %886 = vrot.lane.b32.xlu0 %v839, 16
        %v887 = vpop.permute.xlu0 %886
        %v888 = vsel %vm398, %v887, %v839
        %889 = vrot.lane.b32.xlu0 %v842, 16
        %v890 = vpop.permute.xlu0 %889
        %v891 = vsel %vm398, %v890, %v842
        %892 = vrot.lane.b32.xlu0 %v845, 16
        %v893 = vpop.permute.xlu0 %892
        %v894 = vsel %vm398, %v893, %v845
        %895 = vrot.lane.b32.xlu0 %v848, 16
        %v896 = vpop.permute.xlu0 %895
        %v897 = vsel %vm398, %v896, %v848
        %898 = vrot.lane.b32.xlu0 %v851, 16
        %v899 = vpop.permute.xlu0 %898
        %v900 = vsel %vm398, %v899, %v851
        %901 = vrot.lane.b32.xlu0 %v854, 16
        %v902 = vpop.permute.xlu0 %901
        %v903 = vsel %vm398, %v902, %v854
        %904 = vrot.lane.b32.xlu0 %v882, 16
        %v905 = vpop.permute.xlu0 %904
        %906 = vrot.lane.b32.xlu0 %v885, 16
        %v907 = vpop.permute.xlu0 %906
        %908 = vrot.lane.b32.xlu0 %v888, 16
        %v909 = vpop.permute.xlu0 %908
        %910 = vrot.lane.b32.xlu0 %v891, 16
        %v911 = vpop.permute.xlu0 %910
        %912 = vrot.lane.b32.xlu0 %v894, 16
        %v913 = vpop.permute.xlu0 %912
        %914 = vrot.lane.b32.xlu0 %v897, 16
        %v915 = vpop.permute.xlu0 %914
        %916 = vrot.lane.b32.xlu0 %v900, 16
        %v917 = vpop.permute.xlu0 %916
        %918 = vrot.lane.b32.xlu0 %v903, 16
        %v919 = vpop.permute.xlu0 %918
        %v920 = vsel %vm398, %v905, %v833
        %v921 = vsel %vm398, %v907, %v836
        %v922 = vsel %vm398, %v909, %v839
        %v923 = vsel %vm398, %v911, %v842
        %v924 = vsel %vm398, %v913, %v845
        %v925 = vsel %vm398, %v915, %v848
        %v926 = vsel %vm398, %v917, %v851
        %v927 = vsel %vm398, %v919, %v854
        %936 = vrot.lane.b32.xlu0 %v920, 113
        %v937 = vpop.permute.xlu0 %936
        %938 = vrot.lane.b32.xlu0 %v921, 113
        %v939 = vpop.permute.xlu0 %938
        %940 = vrot.lane.b32.xlu0 %v922, 113
        %v941 = vpop.permute.xlu0 %940
        %942 = vrot.lane.b32.xlu0 %v923, 113
        %v943 = vpop.permute.xlu0 %942
        %944 = vrot.lane.b32.xlu0 %v924, 113
        %v945 = vpop.permute.xlu0 %944
        %946 = vrot.lane.b32.xlu0 %v925, 113
        %v947 = vpop.permute.xlu0 %946
        %948 = vrot.lane.b32.xlu0 %v926, 113
        %v949 = vpop.permute.xlu0 %948
        %950 = vrot.lane.b32.xlu0 %v927, 113
        %v951 = vpop.permute.xlu0 %950
        %v960 = vsel %vm425, %v937, 0.0
        %v961 = vsel %vm425, %v939, 0.0
        %v962 = vsel %vm425, %v941, 0.0
        %v963 = vsel %vm425, %v943, 0.0
        %v964 = vsel %vm425, %v945, 0.0
        %v965 = vsel %vm425, %v947, 0.0
        %v966 = vsel %vm425, %v949, 0.0
        %v967 = vsel %vm425, %v951, 0.0
        %v968 = vadd.f32 %v960, %v857
        %v969 = vadd.f32 %v961, %v860
        %v970 = vadd.f32 %v962, %v863
        %v971 = vadd.f32 %v963, %v866
        %v972 = vadd.f32 %v964, %v869
        %v973 = vadd.f32 %v965, %v872
        %v974 = vadd.f32 %v966, %v875
        %v975 = vadd.f32 %v967, %v878
        %v976 = vadd.f32 %v968, %v631
        %v977 = vadd.f32 %v969, %v634
        %v978 = vadd.f32 %v970, %v637
        %v979 = vadd.f32 %v971, %v640
        %v980 = vadd.f32 %v972, %v643
        %v981 = vadd.f32 %v973, %v646
        %v982 = vadd.f32 %v974, %v649
        %v983 = vadd.f32 %v975, %v652
        %v984 = vtanh.pop %v976
        %v985 = vtanh.pop %v977
        %v986 = vtanh.pop %v978
        %v987 = vtanh.pop %v979
        %v988 = vxor.u32 %v980, 2147483648
        %v989 = vxor.u32 %v981, 2147483648
        %v990 = vxor.u32 %v982, 2147483648
        %v991 = vxor.u32 %v983, 2147483648
        %v992 = vmul.f32 %v988, 1.442695
        %v993 = vpow.pop %v992
        %v994 = vmul.f32 %v989, 1.442695
        %v995 = vpow.pop %v994
        %v996 = vmul.f32 %v990, 1.442695
        %v997 = vpow.pop %v996
        %v998 = vmul.f32 %v991, 1.442695
        %v999 = vpow.pop %v998
        %v1000 = vadd.f32 %v993, 1.0
        %v1001 = vadd.f32 %v995, 1.0
        %v1002 = vadd.f32 %v997, 1.0
        %v1003 = vadd.f32 %v999, 1.0
        %v1004 = vrcp.pop %v1000
        %v1005 = vmul.f32 %v1000, %v1004
        %v1006 = vsub.f32 1.0, %v1005
        %v1007 = vmul.f32 %v1004, %v1006
        %v1008 = vadd.f32 %v1004, %v1007
        %vm1009 = vweird.f32 %v1000
        %vm1010 = vweird.f32 %v1004
        %vm1011 = vmor %vm1009, %vm1010
        %v1012 = vsel %vm1011, %v1004, %v1008
        %v1013 = vand.u32 2147483647, %v1000
        %vm1014 = vcmp.eq.f32.partialorder %v1013, 8.507059e+37
        %v1015 = vand.u32 %v1000, 2147483648
        %v1016 = vor.u32 1.1754944e-38, %v1015
        %v1017 = vsel %vm1014, %v1016, %v1012
        %v1018 = vmul.f32 1.0, %v1017
        %v1019 = vrcp.pop %v1001
        %v1020 = vmul.f32 %v1001, %v1019
        %v1021 = vsub.f32 1.0, %v1020
        %v1022 = vmul.f32 %v1019, %v1021
        %v1023 = vadd.f32 %v1019, %v1022
        %vm1024 = vweird.f32 %v1001
        %vm1025 = vweird.f32 %v1019
        %vm1026 = vmor %vm1024, %vm1025
        %v1027 = vsel %vm1026, %v1019, %v1023
        %v1028 = vand.u32 2147483647, %v1001
        %vm1029 = vcmp.eq.f32.partialorder %v1028, 8.507059e+37
        %v1030 = vand.u32 %v1001, 2147483648
        %v1031 = vor.u32 1.1754944e-38, %v1030
        %v1032 = vsel %vm1029, %v1031, %v1027
        %v1033 = vmul.f32 1.0, %v1032
        %v1034 = vrcp.pop %v1002
        %v1035 = vmul.f32 %v1002, %v1034
        %v1036 = vsub.f32 1.0, %v1035
        %v1037 = vmul.f32 %v1034, %v1036
        %v1038 = vadd.f32 %v1034, %v1037
        %vm1039 = vweird.f32 %v1002
        %vm1040 = vweird.f32 %v1034
        %vm1041 = vmor %vm1039, %vm1040
        %v1042 = vsel %vm1041, %v1034, %v1038
        %v1043 = vand.u32 2147483647, %v1002
        %vm1044 = vcmp.eq.f32.partialorder %v1043, 8.507059e+37
        %v1045 = vand.u32 %v1002, 2147483648
        %v1046 = vor.u32 1.1754944e-38, %v1045
        %v1047 = vsel %vm1044, %v1046, %v1042
        %v1048 = vmul.f32 1.0, %v1047
        %v1049 = vrcp.pop %v1003
        %v1050 = vmul.f32 %v1003, %v1049
        %v1051 = vsub.f32 1.0, %v1050
        %v1052 = vmul.f32 %v1049, %v1051
        %v1053 = vadd.f32 %v1049, %v1052
        %vm1054 = vweird.f32 %v1003
        %vm1055 = vweird.f32 %v1049
        %vm1056 = vmor %vm1054, %vm1055
        %v1057 = vsel %vm1056, %v1049, %v1053
        %v1058 = vand.u32 2147483647, %v1003
        %vm1059 = vcmp.eq.f32.partialorder %v1058, 8.507059e+37
        %v1060 = vand.u32 %v1003, 2147483648
        %v1061 = vor.u32 1.1754944e-38, %v1060
        %v1062 = vsel %vm1059, %v1061, %v1057
        %v1063 = vmul.f32 1.0, %v1062
        %v1064 = vmul.f32 %v984, %v1018
        %v1065 = vmul.f32 %v985, %v1033
        %v1066 = vmul.f32 %v986, %v1048
        %v1067 = vmul.f32 %v987, %v1063
        %v1068 = vld [vmem:[%s5] sm:$0xff]
        %v1069 = vld [vmem:[%s5 + $0x8] sm:$0xff]
        %v1070 = vld [vmem:[%s5 + $0x10] sm:$0xff]
        %v1071 = vld [vmem:[%s5 + $0x18] sm:$0xff]
        %v1072 = vld [vmem:[%s5 + $0x20] sm:$0xff]
        %v1073 = vld [vmem:[%s5 + $0x28] sm:$0xff]
        %v1074 = vld [vmem:[%s5 + $0x30] sm:$0xff]
        %v1075 = vld [vmem:[%s5 + $0x38] sm:$0xff]
        %v1077 = vsel %vm766, %v1068, 0
        %v1080 = vsel %vm766, %v1069, 0
        %v1083 = vsel %vm766, %v1070, 0
        %v1086 = vsel %vm766, %v1071, 0
        %v1089 = vsel %vm766, %v1072, 0
        %v1092 = vsel %vm766, %v1073, 0
        %v1095 = vsel %vm766, %v1074, 0
        %v1098 = vsel %vm766, %v1075, 0
        %1100 = vmatpush.msra.mxu0 0.0
        %1101 = vmatpush.msra.mxu0 0.0
        %1102 = vmatpush.msra.mxu0 0.0
        %1103 = vmatpush.msra.mxu0 0.0
        %1104 = vmatpush.msra.mxu0 0.0
        %1105 = vmatpush.msra.mxu0 0.0
        %1106 = vmatpush.msra.mxu0 0.0
        %1107 = vmatpush.msra.mxu0 0.0
        %1108 = vmatpush.msra.mxu0 0.0
        %1109 = vmatpush.msra.mxu0 0.0
        %1110 = vmatpush.msra.mxu0 0.0
        %1111 = vmatpush.msra.mxu0 0.0
        %1112 = vmatpush.msra.mxu0 %v1067
        %1113 = vmatpush.msra.mxu0 %v1066
        %1114 = vmatpush.msra.mxu0 %v1065
        %1115 = vmatpush.msra.mxu0 %v1064
        %1116 = vmatmul.f32.gmra.mxu0 %v1077
        %v1117 = vpop.f32.mrf.mxu0
        %v1118 = vadd.f32 0.0, %v1117
        %1119 = vmatmul.f32.gmra.mxu0 %v1080
        %v1120 = vpop.f32.mrf.mxu0
        %v1121 = vadd.f32 0.0, %v1120
        %1122 = vmatmul.f32.gmra.mxu0 %v1083
        %v1123 = vpop.f32.mrf.mxu0
        %v1124 = vadd.f32 0.0, %v1123
        %1125 = vmatmul.f32.gmra.mxu0 %v1086
        %v1126 = vpop.f32.mrf.mxu0
        %v1127 = vadd.f32 0.0, %v1126
        %1128 = vmatmul.f32.gmra.mxu0 %v1089
        %v1129 = vpop.f32.mrf.mxu0
        %v1130 = vadd.f32 0.0, %v1129
        %1131 = vmatmul.f32.gmra.mxu0 %v1092
        %v1132 = vpop.f32.mrf.mxu0
        %v1133 = vadd.f32 0.0, %v1132
        %1134 = vmatmul.f32.gmra.mxu0 %v1095
        %v1135 = vpop.f32.mrf.mxu0
        %v1136 = vadd.f32 0.0, %v1135
        %1137 = vmatmul.f32.gmra.mxu0 %v1098
        %v1138 = vpop.f32.mrf.mxu0
        %v1139 = vadd.f32 0.0, %v1138
        %1140 = vdwg.mxu0
        %v1141 = vadd.f32 %v446, %v1118
        %v1142 = vadd.f32 %v447, %v1121
        %v1143 = vadd.f32 %v448, %v1124
        %v1144 = vadd.f32 %v449, %v1127
        %v1145 = vadd.f32 %v1130, 0.0
        %v1146 = vadd.f32 %v1133, 0.0
        %v1147 = vadd.f32 %v1136, 0.0
        %v1148 = vadd.f32 %v1139, 0.0
        %s1149 = scalar_lea.vmem %s3, 128
        %v1150 = vld [vmem:[%s1149] sm:$0xff]
        %v1151 = vld [vmem:[%s1149 + $0x8] sm:$0xff]
        %v1152 = vld [vmem:[%s1149 + $0x10] sm:$0xff]
        %v1153 = vld [vmem:[%s1149 + $0x18] sm:$0xff]
        %v1154 = vld [vmem:[%s1149 + $0x20] sm:$0xff]
        %v1155 = vld [vmem:[%s1149 + $0x28] sm:$0xff]
        %v1156 = vld [vmem:[%s1149 + $0x30] sm:$0xff]
        %v1157 = vld [vmem:[%s1149 + $0x38] sm:$0xff]
        %v1158 = vld [vmem:[%s1149 + $0x40] sm:$0xff]
        %v1159 = vld [vmem:[%s1149 + $0x48] sm:$0xff]
        %v1160 = vld [vmem:[%s1149 + $0x50] sm:$0xff]
        %v1161 = vld [vmem:[%s1149 + $0x58] sm:$0xff]
        %v1162 = vld [vmem:[%s1149 + $0x60] sm:$0xff]
        %v1163 = vld [vmem:[%s1149 + $0x68] sm:$0xff]
        %v1164 = vld [vmem:[%s1149 + $0x70] sm:$0xff]
        %v1165 = vld [vmem:[%s1149 + $0x78] sm:$0xff]
        %v1167 = vsel %vm766, %v1150, 0
        %v1170 = vsel %vm766, %v1151, 0
        %v1173 = vsel %vm766, %v1152, 0
        %v1176 = vsel %vm766, %v1153, 0
        %v1179 = vsel %vm766, %v1154, 0
        %v1182 = vsel %vm766, %v1155, 0
        %v1185 = vsel %vm766, %v1156, 0
        %v1188 = vsel %vm766, %v1157, 0
        %v1191 = vsel %vm766, %v1158, 0
        %v1194 = vsel %vm766, %v1159, 0
        %v1197 = vsel %vm766, %v1160, 0
        %v1200 = vsel %vm766, %v1161, 0
        %v1203 = vsel %vm766, %v1162, 0
        %v1206 = vsel %vm766, %v1163, 0
        %v1209 = vsel %vm766, %v1164, 0
        %v1212 = vsel %vm766, %v1165, 0
        %1214 = vmatpush.msra.mxu0 0.0
        %1215 = vmatpush.msra.mxu0 0.0
        %1216 = vmatpush.msra.mxu0 0.0
        %1217 = vmatpush.msra.mxu0 0.0
        %1218 = vmatpush.msra.mxu0 0.0
        %1219 = vmatpush.msra.mxu0 0.0
        %1220 = vmatpush.msra.mxu0 0.0
        %1221 = vmatpush.msra.mxu0 0.0
        %1222 = vmatpush.msra.mxu0 0.0
        %1223 = vmatpush.msra.mxu0 0.0
        %1224 = vmatpush.msra.mxu0 0.0
        %1225 = vmatpush.msra.mxu0 0.0
        %1226 = vmatpush.msra.mxu0 %v1144
        %1227 = vmatpush.msra.mxu0 %v1143
        %1228 = vmatpush.msra.mxu0 %v1142
        %1229 = vmatpush.msra.mxu0 %v1141
        %1230 = vmatmul.f32.gmra.mxu0 %v1167
        %v1231 = vpop.f32.mrf.mxu0
        %v1232 = vadd.f32 0.0, %v1231
        %1233 = vmatmul.f32.gmra.mxu0 %v1170
        %v1234 = vpop.f32.mrf.mxu0
        %v1235 = vadd.f32 0.0, %v1234
        %1236 = vmatmul.f32.gmra.mxu0 %v1173
        %v1237 = vpop.f32.mrf.mxu0
        %v1238 = vadd.f32 0.0, %v1237
        %1239 = vmatmul.f32.gmra.mxu0 %v1176
        %v1240 = vpop.f32.mrf.mxu0
        %v1241 = vadd.f32 0.0, %v1240
        %1242 = vmatmul.f32.gmra.mxu0 %v1179
        %v1243 = vpop.f32.mrf.mxu0
        %v1244 = vadd.f32 0.0, %v1243
        %1245 = vmatmul.f32.gmra.mxu0 %v1182
        %v1246 = vpop.f32.mrf.mxu0
        %v1247 = vadd.f32 0.0, %v1246
        %1248 = vmatmul.f32.gmra.mxu0 %v1185
        %v1249 = vpop.f32.mrf.mxu0
        %v1250 = vadd.f32 0.0, %v1249
        %1251 = vmatmul.f32.gmra.mxu0 %v1188
        %v1252 = vpop.f32.mrf.mxu0
        %v1253 = vadd.f32 0.0, %v1252
        %1254 = vmatmul.f32.gmra.mxu0 %v1191
        %v1255 = vpop.f32.mrf.mxu0
        %v1256 = vadd.f32 0.0, %v1255
        %1257 = vmatmul.f32.gmra.mxu0 %v1194
        %v1258 = vpop.f32.mrf.mxu0
        %v1259 = vadd.f32 0.0, %v1258
        %1260 = vmatmul.f32.gmra.mxu0 %v1197
        %v1261 = vpop.f32.mrf.mxu0
        %v1262 = vadd.f32 0.0, %v1261
        %1263 = vmatmul.f32.gmra.mxu0 %v1200
        %v1264 = vpop.f32.mrf.mxu0
        %v1265 = vadd.f32 0.0, %v1264
        %1266 = vmatmul.f32.gmra.mxu0 %v1203
        %v1267 = vpop.f32.mrf.mxu0
        %v1268 = vadd.f32 0.0, %v1267
        %1269 = vmatmul.f32.gmra.mxu0 %v1206
        %v1270 = vpop.f32.mrf.mxu0
        %v1271 = vadd.f32 0.0, %v1270
        %1272 = vmatmul.f32.gmra.mxu0 %v1209
        %v1273 = vpop.f32.mrf.mxu0
        %v1274 = vadd.f32 0.0, %v1273
        %1275 = vmatmul.f32.gmra.mxu0 %v1212
        %v1276 = vpop.f32.mrf.mxu0
        %v1277 = vadd.f32 0.0, %v1276
        %1278 = vdwg.mxu0
        %1279 = vrot.lane.b32.xlu0 %v1232, 16
        %v1280 = vpop.permute.xlu0 %1279
        %v1281 = vsel %vm398, %v1280, %v1232
        %1282 = vrot.lane.b32.xlu0 %v1235, 16
        %v1283 = vpop.permute.xlu0 %1282
        %v1284 = vsel %vm398, %v1283, %v1235
        %1285 = vrot.lane.b32.xlu0 %v1238, 16
        %v1286 = vpop.permute.xlu0 %1285
        %v1287 = vsel %vm398, %v1286, %v1238
        %1288 = vrot.lane.b32.xlu0 %v1241, 16
        %v1289 = vpop.permute.xlu0 %1288
        %v1290 = vsel %vm398, %v1289, %v1241
        %1291 = vrot.lane.b32.xlu0 %v1244, 16
        %v1292 = vpop.permute.xlu0 %1291
        %v1293 = vsel %vm398, %v1292, %v1244
        %1294 = vrot.lane.b32.xlu0 %v1247, 16
        %v1295 = vpop.permute.xlu0 %1294
        %v1296 = vsel %vm398, %v1295, %v1247
        %1297 = vrot.lane.b32.xlu0 %v1250, 16
        %v1298 = vpop.permute.xlu0 %1297
        %v1299 = vsel %vm398, %v1298, %v1250
        %1300 = vrot.lane.b32.xlu0 %v1253, 16
        %v1301 = vpop.permute.xlu0 %1300
        %v1302 = vsel %vm398, %v1301, %v1253
        %1303 = vrot.lane.b32.xlu0 %v1281, 16
        %v1304 = vpop.permute.xlu0 %1303
        %1305 = vrot.lane.b32.xlu0 %v1284, 16
        %v1306 = vpop.permute.xlu0 %1305
        %1307 = vrot.lane.b32.xlu0 %v1287, 16
        %v1308 = vpop.permute.xlu0 %1307
        %1309 = vrot.lane.b32.xlu0 %v1290, 16
        %v1310 = vpop.permute.xlu0 %1309
        %1311 = vrot.lane.b32.xlu0 %v1293, 16
        %v1312 = vpop.permute.xlu0 %1311
        %1313 = vrot.lane.b32.xlu0 %v1296, 16
        %v1314 = vpop.permute.xlu0 %1313
        %1315 = vrot.lane.b32.xlu0 %v1299, 16
        %v1316 = vpop.permute.xlu0 %1315
        %1317 = vrot.lane.b32.xlu0 %v1302, 16
        %v1318 = vpop.permute.xlu0 %1317
        %v1319 = vsel %vm398, %v1304, %v1232
        %v1320 = vsel %vm398, %v1306, %v1235
        %v1321 = vsel %vm398, %v1308, %v1238
        %v1322 = vsel %vm398, %v1310, %v1241
        %v1323 = vsel %vm398, %v1312, %v1244
        %v1324 = vsel %vm398, %v1314, %v1247
        %v1325 = vsel %vm398, %v1316, %v1250
        %v1326 = vsel %vm398, %v1318, %v1253
        %vm1327 = vcmp.ge.s32.totalorder %v424, 2
        %1336 = vrot.lane.b32.xlu0 %v1319, 114
        %v1337 = vpop.permute.xlu0 %1336
        %1338 = vrot.lane.b32.xlu0 %v1320, 114
        %v1339 = vpop.permute.xlu0 %1338
        %1340 = vrot.lane.b32.xlu0 %v1321, 114
        %v1341 = vpop.permute.xlu0 %1340
        %1342 = vrot.lane.b32.xlu0 %v1322, 114
        %v1343 = vpop.permute.xlu0 %1342
        %1344 = vrot.lane.b32.xlu0 %v1323, 114
        %v1345 = vpop.permute.xlu0 %1344
        %1346 = vrot.lane.b32.xlu0 %v1324, 114
        %v1347 = vpop.permute.xlu0 %1346
        %1348 = vrot.lane.b32.xlu0 %v1325, 114
        %v1349 = vpop.permute.xlu0 %1348
        %1350 = vrot.lane.b32.xlu0 %v1326, 114
        %v1351 = vpop.permute.xlu0 %1350
        %v1360 = vsel %vm1327, %v1337, 0.0
        %v1361 = vsel %vm1327, %v1339, 0.0
        %v1362 = vsel %vm1327, %v1341, 0.0
        %v1363 = vsel %vm1327, %v1343, 0.0
        %v1364 = vsel %vm1327, %v1345, 0.0
        %v1365 = vsel %vm1327, %v1347, 0.0
        %v1366 = vsel %vm1327, %v1349, 0.0
        %v1367 = vsel %vm1327, %v1351, 0.0
        %v1368 = vadd.f32 %v1360, %v1256
        %v1369 = vadd.f32 %v1361, %v1259
        %v1370 = vadd.f32 %v1362, %v1262
        %v1371 = vadd.f32 %v1363, %v1265
        %v1372 = vadd.f32 %v1364, %v1268
        %v1373 = vadd.f32 %v1365, %v1271
        %v1374 = vadd.f32 %v1366, %v1274
        %v1375 = vadd.f32 %v1367, %v1277
        %v1376 = vadd.f32 %v1368, %v655
        %v1377 = vadd.f32 %v1369, %v658
        %v1378 = vadd.f32 %v1370, %v661
        %v1379 = vadd.f32 %v1371, %v664
        %v1380 = vadd.f32 %v1372, %v667
        %v1381 = vadd.f32 %v1373, %v670
        %v1382 = vadd.f32 %v1374, %v673
        %v1383 = vadd.f32 %v1375, %v676
        %v1384 = vtanh.pop %v1376
        %v1385 = vtanh.pop %v1377
        %v1386 = vtanh.pop %v1378
        %v1387 = vtanh.pop %v1379
        %v1388 = vxor.u32 %v1380, 2147483648
        %v1389 = vxor.u32 %v1381, 2147483648
        %v1390 = vxor.u32 %v1382, 2147483648
        %v1391 = vxor.u32 %v1383, 2147483648
        %v1392 = vmul.f32 %v1388, 1.442695
        %v1393 = vpow.pop %v1392
        %v1394 = vmul.f32 %v1389, 1.442695
        %v1395 = vpow.pop %v1394
        %v1396 = vmul.f32 %v1390, 1.442695
        %v1397 = vpow.pop %v1396
        %v1398 = vmul.f32 %v1391, 1.442695
        %v1399 = vpow.pop %v1398
        %v1400 = vadd.f32 %v1393, 1.0
        %v1401 = vadd.f32 %v1395, 1.0
        %v1402 = vadd.f32 %v1397, 1.0
        %v1403 = vadd.f32 %v1399, 1.0
        %v1404 = vrcp.pop %v1400
        %v1405 = vmul.f32 %v1400, %v1404
        %v1406 = vsub.f32 1.0, %v1405
        %v1407 = vmul.f32 %v1404, %v1406
        %v1408 = vadd.f32 %v1404, %v1407
        %vm1409 = vweird.f32 %v1400
        %vm1410 = vweird.f32 %v1404
        %vm1411 = vmor %vm1409, %vm1410
        %v1412 = vsel %vm1411, %v1404, %v1408
        %v1413 = vand.u32 2147483647, %v1400
        %vm1414 = vcmp.eq.f32.partialorder %v1413, 8.507059e+37
        %v1415 = vand.u32 %v1400, 2147483648
        %v1416 = vor.u32 1.1754944e-38, %v1415
        %v1417 = vsel %vm1414, %v1416, %v1412
        %v1418 = vmul.f32 1.0, %v1417
        %v1419 = vrcp.pop %v1401
        %v1420 = vmul.f32 %v1401, %v1419
        %v1421 = vsub.f32 1.0, %v1420
        %v1422 = vmul.f32 %v1419, %v1421
        %v1423 = vadd.f32 %v1419, %v1422
        %vm1424 = vweird.f32 %v1401
        %vm1425 = vweird.f32 %v1419
        %vm1426 = vmor %vm1424, %vm1425
        %v1427 = vsel %vm1426, %v1419, %v1423
        %v1428 = vand.u32 2147483647, %v1401
        %vm1429 = vcmp.eq.f32.partialorder %v1428, 8.507059e+37
        %v1430 = vand.u32 %v1401, 2147483648
        %v1431 = vor.u32 1.1754944e-38, %v1430
        %v1432 = vsel %vm1429, %v1431, %v1427
        %v1433 = vmul.f32 1.0, %v1432
        %v1434 = vrcp.pop %v1402
        %v1435 = vmul.f32 %v1402, %v1434
        %v1436 = vsub.f32 1.0, %v1435
        %v1437 = vmul.f32 %v1434, %v1436
        %v1438 = vadd.f32 %v1434, %v1437
        %vm1439 = vweird.f32 %v1402
        %vm1440 = vweird.f32 %v1434
        %vm1441 = vmor %vm1439, %vm1440
        %v1442 = vsel %vm1441, %v1434, %v1438
        %v1443 = vand.u32 2147483647, %v1402
        %vm1444 = vcmp.eq.f32.partialorder %v1443, 8.507059e+37
        %v1445 = vand.u32 %v1402, 2147483648
        %v1446 = vor.u32 1.1754944e-38, %v1445
        %v1447 = vsel %vm1444, %v1446, %v1442
        %v1448 = vmul.f32 1.0, %v1447
        %v1449 = vrcp.pop %v1403
        %v1450 = vmul.f32 %v1403, %v1449
        %v1451 = vsub.f32 1.0, %v1450
        %v1452 = vmul.f32 %v1449, %v1451
        %v1453 = vadd.f32 %v1449, %v1452
        %vm1454 = vweird.f32 %v1403
        %vm1455 = vweird.f32 %v1449
        %vm1456 = vmor %vm1454, %vm1455
        %v1457 = vsel %vm1456, %v1449, %v1453
        %v1458 = vand.u32 2147483647, %v1403
        %vm1459 = vcmp.eq.f32.partialorder %v1458, 8.507059e+37
        %v1460 = vand.u32 %v1403, 2147483648
        %v1461 = vor.u32 1.1754944e-38, %v1460
        %v1462 = vsel %vm1459, %v1461, %v1457
        %v1463 = vmul.f32 1.0, %v1462
        %v1464 = vmul.f32 %v1384, %v1418
        %v1465 = vmul.f32 %v1385, %v1433
        %v1466 = vmul.f32 %v1386, %v1448
        %v1467 = vmul.f32 %v1387, %v1463
        %s1468 = scalar_lea.vmem %s5, 64
        %v1469 = vld [vmem:[%s1468] sm:$0xff]
        %v1470 = vld [vmem:[%s1468 + $0x8] sm:$0xff]
        %v1471 = vld [vmem:[%s1468 + $0x10] sm:$0xff]
        %v1472 = vld [vmem:[%s1468 + $0x18] sm:$0xff]
        %v1473 = vld [vmem:[%s1468 + $0x20] sm:$0xff]
        %v1474 = vld [vmem:[%s1468 + $0x28] sm:$0xff]
        %v1475 = vld [vmem:[%s1468 + $0x30] sm:$0xff]
        %v1476 = vld [vmem:[%s1468 + $0x38] sm:$0xff]
        %v1478 = vsel %vm766, %v1469, 0
        %v1481 = vsel %vm766, %v1470, 0
        %v1484 = vsel %vm766, %v1471, 0
        %v1487 = vsel %vm766, %v1472, 0
        %v1490 = vsel %vm766, %v1473, 0
        %v1493 = vsel %vm766, %v1474, 0
        %v1496 = vsel %vm766, %v1475, 0
        %v1499 = vsel %vm766, %v1476, 0
        %1501 = vmatpush.msra.mxu0 0.0
        %1502 = vmatpush.msra.mxu0 0.0
        %1503 = vmatpush.msra.mxu0 0.0
        %1504 = vmatpush.msra.mxu0 0.0
        %1505 = vmatpush.msra.mxu0 0.0
        %1506 = vmatpush.msra.mxu0 0.0
        %1507 = vmatpush.msra.mxu0 0.0
        %1508 = vmatpush.msra.mxu0 0.0
        %1509 = vmatpush.msra.mxu0 0.0
        %1510 = vmatpush.msra.mxu0 0.0
        %1511 = vmatpush.msra.mxu0 0.0
        %1512 = vmatpush.msra.mxu0 0.0
        %1513 = vmatpush.msra.mxu0 %v1467
        %1514 = vmatpush.msra.mxu0 %v1466
        %1515 = vmatpush.msra.mxu0 %v1465
        %1516 = vmatpush.msra.mxu0 %v1464
        %1517 = vmatmul.f32.gmra.mxu0 %v1478
        %v1518 = vpop.f32.mrf.mxu0
        %v1519 = vadd.f32 0.0, %v1518
        %1520 = vmatmul.f32.gmra.mxu0 %v1481
        %v1521 = vpop.f32.mrf.mxu0
        %v1522 = vadd.f32 0.0, %v1521
        %1523 = vmatmul.f32.gmra.mxu0 %v1484
        %v1524 = vpop.f32.mrf.mxu0
        %v1525 = vadd.f32 0.0, %v1524
        %1526 = vmatmul.f32.gmra.mxu0 %v1487
        %v1527 = vpop.f32.mrf.mxu0
        %v1528 = vadd.f32 0.0, %v1527
        %1529 = vmatmul.f32.gmra.mxu0 %v1490
        %v1530 = vpop.f32.mrf.mxu0
        %v1531 = vadd.f32 0.0, %v1530
        %1532 = vmatmul.f32.gmra.mxu0 %v1493
        %v1533 = vpop.f32.mrf.mxu0
        %v1534 = vadd.f32 0.0, %v1533
        %1535 = vmatmul.f32.gmra.mxu0 %v1496
        %v1536 = vpop.f32.mrf.mxu0
        %v1537 = vadd.f32 0.0, %v1536
        %1538 = vmatmul.f32.gmra.mxu0 %v1499
        %v1539 = vpop.f32.mrf.mxu0
        %v1540 = vadd.f32 0.0, %v1539
        %1541 = vdwg.mxu0
        %v1542 = vadd.f32 %v1141, %v1519
        %v1543 = vadd.f32 %v1142, %v1522
        %v1544 = vadd.f32 %v1143, %v1525
        %v1545 = vadd.f32 %v1144, %v1528
        %v1546 = vadd.f32 %v1145, %v1531
        %v1547 = vadd.f32 %v1146, %v1534
        %v1548 = vadd.f32 %v1147, %v1537
        %v1549 = vadd.f32 %v1148, %v1540
        %s1550 = scalar_lea.vmem %s3, 256
        %v1551 = vld [vmem:[%s1550] sm:$0xff]
        %v1552 = vld [vmem:[%s1550 + $0x8] sm:$0xff]
        %v1553 = vld [vmem:[%s1550 + $0x10] sm:$0xff]
        %v1554 = vld [vmem:[%s1550 + $0x18] sm:$0xff]
        %v1555 = vld [vmem:[%s1550 + $0x20] sm:$0xff]
        %v1556 = vld [vmem:[%s1550 + $0x28] sm:$0xff]
        %v1557 = vld [vmem:[%s1550 + $0x30] sm:$0xff]
        %v1558 = vld [vmem:[%s1550 + $0x38] sm:$0xff]
        %v1559 = vld [vmem:[%s1550 + $0x40] sm:$0xff]
        %v1560 = vld [vmem:[%s1550 + $0x48] sm:$0xff]
        %v1561 = vld [vmem:[%s1550 + $0x50] sm:$0xff]
        %v1562 = vld [vmem:[%s1550 + $0x58] sm:$0xff]
        %v1563 = vld [vmem:[%s1550 + $0x60] sm:$0xff]
        %v1564 = vld [vmem:[%s1550 + $0x68] sm:$0xff]
        %v1565 = vld [vmem:[%s1550 + $0x70] sm:$0xff]
        %v1566 = vld [vmem:[%s1550 + $0x78] sm:$0xff]
        %v1568 = vsel %vm766, %v1551, 0
        %v1571 = vsel %vm766, %v1552, 0
        %v1574 = vsel %vm766, %v1553, 0
        %v1577 = vsel %vm766, %v1554, 0
        %v1580 = vsel %vm766, %v1555, 0
        %v1583 = vsel %vm766, %v1556, 0
        %v1586 = vsel %vm766, %v1557, 0
        %v1589 = vsel %vm766, %v1558, 0
        %v1592 = vsel %vm766, %v1559, 0
        %v1595 = vsel %vm766, %v1560, 0
        %v1598 = vsel %vm766, %v1561, 0
        %v1601 = vsel %vm766, %v1562, 0
        %v1604 = vsel %vm766, %v1563, 0
        %v1607 = vsel %vm766, %v1564, 0
        %v1610 = vsel %vm766, %v1565, 0
        %v1613 = vsel %vm766, %v1566, 0
        %1615 = vmatpush.msra.mxu0 0.0
        %1616 = vmatpush.msra.mxu0 0.0
        %1617 = vmatpush.msra.mxu0 0.0
        %1618 = vmatpush.msra.mxu0 0.0
        %1619 = vmatpush.msra.mxu0 0.0
        %1620 = vmatpush.msra.mxu0 0.0
        %1621 = vmatpush.msra.mxu0 0.0
        %1622 = vmatpush.msra.mxu0 0.0
        %1623 = vmatpush.msra.mxu0 0.0
        %1624 = vmatpush.msra.mxu0 0.0
        %1625 = vmatpush.msra.mxu0 0.0
        %1626 = vmatpush.msra.mxu0 0.0
        %1627 = vmatpush.msra.mxu0 %v1545
        %1628 = vmatpush.msra.mxu0 %v1544
        %1629 = vmatpush.msra.mxu0 %v1543
        %1630 = vmatpush.msra.mxu0 %v1542
        %1631 = vmatmul.f32.gmra.mxu0 %v1568
        %v1632 = vpop.f32.mrf.mxu0
        %v1633 = vadd.f32 0.0, %v1632
        %1634 = vmatmul.f32.gmra.mxu0 %v1571
        %v1635 = vpop.f32.mrf.mxu0
        %v1636 = vadd.f32 0.0, %v1635
        %1637 = vmatmul.f32.gmra.mxu0 %v1574
        %v1638 = vpop.f32.mrf.mxu0
        %v1639 = vadd.f32 0.0, %v1638
        %1640 = vmatmul.f32.gmra.mxu0 %v1577
        %v1641 = vpop.f32.mrf.mxu0
        %v1642 = vadd.f32 0.0, %v1641
        %1643 = vmatmul.f32.gmra.mxu0 %v1580
        %v1644 = vpop.f32.mrf.mxu0
        %v1645 = vadd.f32 0.0, %v1644
        %1646 = vmatmul.f32.gmra.mxu0 %v1583
        %v1647 = vpop.f32.mrf.mxu0
        %v1648 = vadd.f32 0.0, %v1647
        %1649 = vmatmul.f32.gmra.mxu0 %v1586
        %v1650 = vpop.f32.mrf.mxu0
        %v1651 = vadd.f32 0.0, %v1650
        %1652 = vmatmul.f32.gmra.mxu0 %v1589
        %v1653 = vpop.f32.mrf.mxu0
        %v1654 = vadd.f32 0.0, %v1653
        %1655 = vmatmul.f32.gmra.mxu0 %v1592
        %v1656 = vpop.f32.mrf.mxu0
        %v1657 = vadd.f32 0.0, %v1656
        %1658 = vmatmul.f32.gmra.mxu0 %v1595
        %v1659 = vpop.f32.mrf.mxu0
        %v1660 = vadd.f32 0.0, %v1659
        %1661 = vmatmul.f32.gmra.mxu0 %v1598
        %v1662 = vpop.f32.mrf.mxu0
        %v1663 = vadd.f32 0.0, %v1662
        %1664 = vmatmul.f32.gmra.mxu0 %v1601
        %v1665 = vpop.f32.mrf.mxu0
        %v1666 = vadd.f32 0.0, %v1665
        %1667 = vmatmul.f32.gmra.mxu0 %v1604
        %v1668 = vpop.f32.mrf.mxu0
        %v1669 = vadd.f32 0.0, %v1668
        %1670 = vmatmul.f32.gmra.mxu0 %v1607
        %v1671 = vpop.f32.mrf.mxu0
        %v1672 = vadd.f32 0.0, %v1671
        %1673 = vmatmul.f32.gmra.mxu0 %v1610
        %v1674 = vpop.f32.mrf.mxu0
        %v1675 = vadd.f32 0.0, %v1674
        %1676 = vmatmul.f32.gmra.mxu0 %v1613
        %v1677 = vpop.f32.mrf.mxu0
        %v1678 = vadd.f32 0.0, %v1677
        %1679 = vdwg.mxu0
        %1680 = vrot.lane.b32.xlu0 %v1633, 16
        %v1681 = vpop.permute.xlu0 %1680
        %v1682 = vsel %vm398, %v1681, %v1633
        %1683 = vrot.lane.b32.xlu0 %v1636, 16
        %v1684 = vpop.permute.xlu0 %1683
        %v1685 = vsel %vm398, %v1684, %v1636
        %1686 = vrot.lane.b32.xlu0 %v1639, 16
        %v1687 = vpop.permute.xlu0 %1686
        %v1688 = vsel %vm398, %v1687, %v1639
        %1689 = vrot.lane.b32.xlu0 %v1642, 16
        %v1690 = vpop.permute.xlu0 %1689
        %v1691 = vsel %vm398, %v1690, %v1642
        %1692 = vrot.lane.b32.xlu0 %v1645, 16
        %v1693 = vpop.permute.xlu0 %1692
        %v1694 = vsel %vm398, %v1693, %v1645
        %1695 = vrot.lane.b32.xlu0 %v1648, 16
        %v1696 = vpop.permute.xlu0 %1695
        %v1697 = vsel %vm398, %v1696, %v1648
        %1698 = vrot.lane.b32.xlu0 %v1651, 16
        %v1699 = vpop.permute.xlu0 %1698
        %v1700 = vsel %vm398, %v1699, %v1651
        %1701 = vrot.lane.b32.xlu0 %v1654, 16
        %v1702 = vpop.permute.xlu0 %1701
        %v1703 = vsel %vm398, %v1702, %v1654
        %1704 = vrot.lane.b32.xlu0 %v1682, 16
        %v1705 = vpop.permute.xlu0 %1704
        %1706 = vrot.lane.b32.xlu0 %v1685, 16
        %v1707 = vpop.permute.xlu0 %1706
        %1708 = vrot.lane.b32.xlu0 %v1688, 16
        %v1709 = vpop.permute.xlu0 %1708
        %1710 = vrot.lane.b32.xlu0 %v1691, 16
        %v1711 = vpop.permute.xlu0 %1710
        %1712 = vrot.lane.b32.xlu0 %v1694, 16
        %v1713 = vpop.permute.xlu0 %1712
        %1714 = vrot.lane.b32.xlu0 %v1697, 16
        %v1715 = vpop.permute.xlu0 %1714
        %1716 = vrot.lane.b32.xlu0 %v1700, 16
        %v1717 = vpop.permute.xlu0 %1716
        %1718 = vrot.lane.b32.xlu0 %v1703, 16
        %v1719 = vpop.permute.xlu0 %1718
        %v1720 = vsel %vm398, %v1705, %v1633
        %v1721 = vsel %vm398, %v1707, %v1636
        %v1722 = vsel %vm398, %v1709, %v1639
        %v1723 = vsel %vm398, %v1711, %v1642
        %v1724 = vsel %vm398, %v1713, %v1645
        %v1725 = vsel %vm398, %v1715, %v1648
        %v1726 = vsel %vm398, %v1717, %v1651
        %v1727 = vsel %vm398, %v1719, %v1654
        %vm1728 = vcmp.ge.s32.totalorder %v424, 4
        %1737 = vrot.lane.b32.xlu0 %v1720, 116
        %v1738 = vpop.permute.xlu0 %1737
        %1739 = vrot.lane.b32.xlu0 %v1721, 116
        %v1740 = vpop.permute.xlu0 %1739
        %1741 = vrot.lane.b32.xlu0 %v1722, 116
        %v1742 = vpop.permute.xlu0 %1741
        %1743 = vrot.lane.b32.xlu0 %v1723, 116
        %v1744 = vpop.permute.xlu0 %1743
        %1745 = vrot.lane.b32.xlu0 %v1724, 116
        %v1746 = vpop.permute.xlu0 %1745
        %1747 = vrot.lane.b32.xlu0 %v1725, 116
        %v1748 = vpop.permute.xlu0 %1747
        %1749 = vrot.lane.b32.xlu0 %v1726, 116
        %v1750 = vpop.permute.xlu0 %1749
        %1751 = vrot.lane.b32.xlu0 %v1727, 116
        %v1752 = vpop.permute.xlu0 %1751
        %v1761 = vsel %vm1728, %v1738, 0.0
        %v1762 = vsel %vm1728, %v1740, 0.0
        %v1763 = vsel %vm1728, %v1742, 0.0
        %v1764 = vsel %vm1728, %v1744, 0.0
        %v1765 = vsel %vm1728, %v1746, 0.0
        %v1766 = vsel %vm1728, %v1748, 0.0
        %v1767 = vsel %vm1728, %v1750, 0.0
        %v1768 = vsel %vm1728, %v1752, 0.0
        %v1769 = vadd.f32 %v1761, %v1657
        %v1770 = vadd.f32 %v1762, %v1660
        %v1771 = vadd.f32 %v1763, %v1663
        %v1772 = vadd.f32 %v1764, %v1666
        %v1773 = vadd.f32 %v1765, %v1669
        %v1774 = vadd.f32 %v1766, %v1672
        %v1775 = vadd.f32 %v1767, %v1675
        %v1776 = vadd.f32 %v1768, %v1678
        %v1777 = vadd.f32 %v1769, %v679
        %v1778 = vadd.f32 %v1770, %v682
        %v1779 = vadd.f32 %v1771, %v685
        %v1780 = vadd.f32 %v1772, %v688
        %v1781 = vadd.f32 %v1773, %v691
        %v1782 = vadd.f32 %v1774, %v694
        %v1783 = vadd.f32 %v1775, %v697
        %v1784 = vadd.f32 %v1776, %v700
        %v1785 = vtanh.pop %v1777
        %v1786 = vtanh.pop %v1778
        %v1787 = vtanh.pop %v1779
        %v1788 = vtanh.pop %v1780
        %v1789 = vxor.u32 %v1781, 2147483648
        %v1790 = vxor.u32 %v1782, 2147483648
        %v1791 = vxor.u32 %v1783, 2147483648
        %v1792 = vxor.u32 %v1784, 2147483648
        %v1793 = vmul.f32 %v1789, 1.442695
        %v1794 = vpow.pop %v1793
        %v1795 = vmul.f32 %v1790, 1.442695
        %v1796 = vpow.pop %v1795
        %v1797 = vmul.f32 %v1791, 1.442695
        %v1798 = vpow.pop %v1797
        %v1799 = vmul.f32 %v1792, 1.442695
        %v1800 = vpow.pop %v1799
        %v1801 = vadd.f32 %v1794, 1.0
        %v1802 = vadd.f32 %v1796, 1.0
        %v1803 = vadd.f32 %v1798, 1.0
        %v1804 = vadd.f32 %v1800, 1.0
        %v1805 = vrcp.pop %v1801
        %v1806 = vmul.f32 %v1801, %v1805
        %v1807 = vsub.f32 1.0, %v1806
        %v1808 = vmul.f32 %v1805, %v1807
        %v1809 = vadd.f32 %v1805, %v1808
        %vm1810 = vweird.f32 %v1801
        %vm1811 = vweird.f32 %v1805
        %vm1812 = vmor %vm1810, %vm1811
        %v1813 = vsel %vm1812, %v1805, %v1809
        %v1814 = vand.u32 2147483647, %v1801
        %vm1815 = vcmp.eq.f32.partialorder %v1814, 8.507059e+37
        %v1816 = vand.u32 %v1801, 2147483648
        %v1817 = vor.u32 1.1754944e-38, %v1816
        %v1818 = vsel %vm1815, %v1817, %v1813
        %v1819 = vmul.f32 1.0, %v1818
        %v1820 = vrcp.pop %v1802
        %v1821 = vmul.f32 %v1802, %v1820
        %v1822 = vsub.f32 1.0, %v1821
        %v1823 = vmul.f32 %v1820, %v1822
        %v1824 = vadd.f32 %v1820, %v1823
        %vm1825 = vweird.f32 %v1802
        %vm1826 = vweird.f32 %v1820
        %vm1827 = vmor %vm1825, %vm1826
        %v1828 = vsel %vm1827, %v1820, %v1824
        %v1829 = vand.u32 2147483647, %v1802
        %vm1830 = vcmp.eq.f32.partialorder %v1829, 8.507059e+37
        %v1831 = vand.u32 %v1802, 2147483648
        %v1832 = vor.u32 1.1754944e-38, %v1831
        %v1833 = vsel %vm1830, %v1832, %v1828
        %v1834 = vmul.f32 1.0, %v1833
        %v1835 = vrcp.pop %v1803
        %v1836 = vmul.f32 %v1803, %v1835
        %v1837 = vsub.f32 1.0, %v1836
        %v1838 = vmul.f32 %v1835, %v1837
        %v1839 = vadd.f32 %v1835, %v1838
        %vm1840 = vweird.f32 %v1803
        %vm1841 = vweird.f32 %v1835
        %vm1842 = vmor %vm1840, %vm1841
        %v1843 = vsel %vm1842, %v1835, %v1839
        %v1844 = vand.u32 2147483647, %v1803
        %vm1845 = vcmp.eq.f32.partialorder %v1844, 8.507059e+37
        %v1846 = vand.u32 %v1803, 2147483648
        %v1847 = vor.u32 1.1754944e-38, %v1846
        %v1848 = vsel %vm1845, %v1847, %v1843
        %v1849 = vmul.f32 1.0, %v1848
        %v1850 = vrcp.pop %v1804
        %v1851 = vmul.f32 %v1804, %v1850
        %v1852 = vsub.f32 1.0, %v1851
        %v1853 = vmul.f32 %v1850, %v1852
        %v1854 = vadd.f32 %v1850, %v1853
        %vm1855 = vweird.f32 %v1804
        %vm1856 = vweird.f32 %v1850
        %vm1857 = vmor %vm1855, %vm1856
        %v1858 = vsel %vm1857, %v1850, %v1854
        %v1859 = vand.u32 2147483647, %v1804
        %vm1860 = vcmp.eq.f32.partialorder %v1859, 8.507059e+37
        %v1861 = vand.u32 %v1804, 2147483648
        %v1862 = vor.u32 1.1754944e-38, %v1861
        %v1863 = vsel %vm1860, %v1862, %v1858
        %v1864 = vmul.f32 1.0, %v1863
        %v1865 = vmul.f32 %v1785, %v1819
        %v1866 = vmul.f32 %v1786, %v1834
        %v1867 = vmul.f32 %v1787, %v1849
        %v1868 = vmul.f32 %v1788, %v1864
        %s1869 = scalar_lea.vmem %s5, 128
        %v1870 = vld [vmem:[%s1869] sm:$0xff]
        %v1871 = vld [vmem:[%s1869 + $0x8] sm:$0xff]
        %v1872 = vld [vmem:[%s1869 + $0x10] sm:$0xff]
        %v1873 = vld [vmem:[%s1869 + $0x18] sm:$0xff]
        %v1874 = vld [vmem:[%s1869 + $0x20] sm:$0xff]
        %v1875 = vld [vmem:[%s1869 + $0x28] sm:$0xff]
        %v1876 = vld [vmem:[%s1869 + $0x30] sm:$0xff]
        %v1877 = vld [vmem:[%s1869 + $0x38] sm:$0xff]
        %v1879 = vsel %vm766, %v1870, 0
        %v1882 = vsel %vm766, %v1871, 0
        %v1885 = vsel %vm766, %v1872, 0
        %v1888 = vsel %vm766, %v1873, 0
        %v1891 = vsel %vm766, %v1874, 0
        %v1894 = vsel %vm766, %v1875, 0
        %v1897 = vsel %vm766, %v1876, 0
        %v1900 = vsel %vm766, %v1877, 0
        %1902 = vmatpush.msra.mxu0 0.0
        %1903 = vmatpush.msra.mxu0 0.0
        %1904 = vmatpush.msra.mxu0 0.0
        %1905 = vmatpush.msra.mxu0 0.0
        %1906 = vmatpush.msra.mxu0 0.0
        %1907 = vmatpush.msra.mxu0 0.0
        %1908 = vmatpush.msra.mxu0 0.0
        %1909 = vmatpush.msra.mxu0 0.0
        %1910 = vmatpush.msra.mxu0 0.0
        %1911 = vmatpush.msra.mxu0 0.0
        %1912 = vmatpush.msra.mxu0 0.0
        %1913 = vmatpush.msra.mxu0 0.0
        %1914 = vmatpush.msra.mxu0 %v1868
        %1915 = vmatpush.msra.mxu0 %v1867
        %1916 = vmatpush.msra.mxu0 %v1866
        %1917 = vmatpush.msra.mxu0 %v1865
        %1918 = vmatmul.f32.gmra.mxu0 %v1879
        %v1919 = vpop.f32.mrf.mxu0
        %v1920 = vadd.f32 0.0, %v1919
        %1921 = vmatmul.f32.gmra.mxu0 %v1882
        %v1922 = vpop.f32.mrf.mxu0
        %v1923 = vadd.f32 0.0, %v1922
        %1924 = vmatmul.f32.gmra.mxu0 %v1885
        %v1925 = vpop.f32.mrf.mxu0
        %v1926 = vadd.f32 0.0, %v1925
        %1927 = vmatmul.f32.gmra.mxu0 %v1888
        %v1928 = vpop.f32.mrf.mxu0
        %v1929 = vadd.f32 0.0, %v1928
        %1930 = vmatmul.f32.gmra.mxu0 %v1891
        %v1931 = vpop.f32.mrf.mxu0
        %v1932 = vadd.f32 0.0, %v1931
        %1933 = vmatmul.f32.gmra.mxu0 %v1894
        %v1934 = vpop.f32.mrf.mxu0
        %v1935 = vadd.f32 0.0, %v1934
        %1936 = vmatmul.f32.gmra.mxu0 %v1897
        %v1937 = vpop.f32.mrf.mxu0
        %v1938 = vadd.f32 0.0, %v1937
        %1939 = vmatmul.f32.gmra.mxu0 %v1900
        %v1940 = vpop.f32.mrf.mxu0
        %v1941 = vadd.f32 0.0, %v1940
        %1942 = vdwg.mxu0
        %v1943 = vadd.f32 %v1542, %v1920
        %v1944 = vadd.f32 %v1543, %v1923
        %v1945 = vadd.f32 %v1544, %v1926
        %v1946 = vadd.f32 %v1545, %v1929
        %v1947 = vadd.f32 %v1546, %v1932
        %v1948 = vadd.f32 %v1547, %v1935
        %v1949 = vadd.f32 %v1548, %v1938
        %v1950 = vadd.f32 %v1549, %v1941
        %s1951 = scalar_lea.vmem %s3, 384
        %v1952 = vld [vmem:[%s1951] sm:$0xff]
        %v1953 = vld [vmem:[%s1951 + $0x8] sm:$0xff]
        %v1954 = vld [vmem:[%s1951 + $0x10] sm:$0xff]
        %v1955 = vld [vmem:[%s1951 + $0x18] sm:$0xff]
        %v1956 = vld [vmem:[%s1951 + $0x20] sm:$0xff]
        %v1957 = vld [vmem:[%s1951 + $0x28] sm:$0xff]
        %v1958 = vld [vmem:[%s1951 + $0x30] sm:$0xff]
        %v1959 = vld [vmem:[%s1951 + $0x38] sm:$0xff]
        %v1960 = vld [vmem:[%s1951 + $0x40] sm:$0xff]
        %v1961 = vld [vmem:[%s1951 + $0x48] sm:$0xff]
        %v1962 = vld [vmem:[%s1951 + $0x50] sm:$0xff]
        %v1963 = vld [vmem:[%s1951 + $0x58] sm:$0xff]
        %v1964 = vld [vmem:[%s1951 + $0x60] sm:$0xff]
        %v1965 = vld [vmem:[%s1951 + $0x68] sm:$0xff]
        %v1966 = vld [vmem:[%s1951 + $0x70] sm:$0xff]
        %v1967 = vld [vmem:[%s1951 + $0x78] sm:$0xff]
        %v1969 = vsel %vm766, %v1952, 0
        %v1972 = vsel %vm766, %v1953, 0
        %v1975 = vsel %vm766, %v1954, 0
        %v1978 = vsel %vm766, %v1955, 0
        %v1981 = vsel %vm766, %v1956, 0
        %v1984 = vsel %vm766, %v1957, 0
        %v1987 = vsel %vm766, %v1958, 0
        %v1990 = vsel %vm766, %v1959, 0
        %v1993 = vsel %vm766, %v1960, 0
        %v1996 = vsel %vm766, %v1961, 0
        %v1999 = vsel %vm766, %v1962, 0
        %v2002 = vsel %vm766, %v1963, 0
        %v2005 = vsel %vm766, %v1964, 0
        %v2008 = vsel %vm766, %v1965, 0
        %v2011 = vsel %vm766, %v1966, 0
        %v2014 = vsel %vm766, %v1967, 0
        %2016 = vmatpush.msra.mxu0 0.0
        %2017 = vmatpush.msra.mxu0 0.0
        %2018 = vmatpush.msra.mxu0 0.0
        %2019 = vmatpush.msra.mxu0 0.0
        %2020 = vmatpush.msra.mxu0 0.0
        %2021 = vmatpush.msra.mxu0 0.0
        %2022 = vmatpush.msra.mxu0 0.0
        %2023 = vmatpush.msra.mxu0 0.0
        %2024 = vmatpush.msra.mxu0 0.0
        %2025 = vmatpush.msra.mxu0 0.0
        %2026 = vmatpush.msra.mxu0 0.0
        %2027 = vmatpush.msra.mxu0 0.0
        %2028 = vmatpush.msra.mxu0 %v1946
        %2029 = vmatpush.msra.mxu0 %v1945
        %2030 = vmatpush.msra.mxu0 %v1944
        %2031 = vmatpush.msra.mxu0 %v1943
        %2032 = vmatmul.f32.gmra.mxu0 %v1969
        %v2033 = vpop.f32.mrf.mxu0
        %v2034 = vadd.f32 0.0, %v2033
        %2035 = vmatmul.f32.gmra.mxu0 %v1972
        %v2036 = vpop.f32.mrf.mxu0
        %v2037 = vadd.f32 0.0, %v2036
        %2038 = vmatmul.f32.gmra.mxu0 %v1975
        %v2039 = vpop.f32.mrf.mxu0
        %v2040 = vadd.f32 0.0, %v2039
        %2041 = vmatmul.f32.gmra.mxu0 %v1978
        %v2042 = vpop.f32.mrf.mxu0
        %v2043 = vadd.f32 0.0, %v2042
        %2044 = vmatmul.f32.gmra.mxu0 %v1981
        %v2045 = vpop.f32.mrf.mxu0
        %v2046 = vadd.f32 0.0, %v2045
        %2047 = vmatmul.f32.gmra.mxu0 %v1984
        %v2048 = vpop.f32.mrf.mxu0
        %v2049 = vadd.f32 0.0, %v2048
        %2050 = vmatmul.f32.gmra.mxu0 %v1987
        %v2051 = vpop.f32.mrf.mxu0
        %v2052 = vadd.f32 0.0, %v2051
        %2053 = vmatmul.f32.gmra.mxu0 %v1990
        %v2054 = vpop.f32.mrf.mxu0
        %v2055 = vadd.f32 0.0, %v2054
        %2056 = vmatmul.f32.gmra.mxu0 %v1993
        %v2057 = vpop.f32.mrf.mxu0
        %v2058 = vadd.f32 0.0, %v2057
        %2059 = vmatmul.f32.gmra.mxu0 %v1996
        %v2060 = vpop.f32.mrf.mxu0
        %v2061 = vadd.f32 0.0, %v2060
        %2062 = vmatmul.f32.gmra.mxu0 %v1999
        %v2063 = vpop.f32.mrf.mxu0
        %v2064 = vadd.f32 0.0, %v2063
        %2065 = vmatmul.f32.gmra.mxu0 %v2002
        %v2066 = vpop.f32.mrf.mxu0
        %v2067 = vadd.f32 0.0, %v2066
        %2068 = vmatmul.f32.gmra.mxu0 %v2005
        %v2069 = vpop.f32.mrf.mxu0
        %v2070 = vadd.f32 0.0, %v2069
        %2071 = vmatmul.f32.gmra.mxu0 %v2008
        %v2072 = vpop.f32.mrf.mxu0
        %v2073 = vadd.f32 0.0, %v2072
        %2074 = vmatmul.f32.gmra.mxu0 %v2011
        %v2075 = vpop.f32.mrf.mxu0
        %v2076 = vadd.f32 0.0, %v2075
        %2077 = vmatmul.f32.gmra.mxu0 %v2014
        %v2078 = vpop.f32.mrf.mxu0
        %v2079 = vadd.f32 0.0, %v2078
        %2080 = vdwg.mxu0
        %2081 = vrot.lane.b32.xlu0 %v2034, 16
        %v2082 = vpop.permute.xlu0 %2081
        %v2083 = vsel %vm398, %v2082, %v2034
        %2084 = vrot.lane.b32.xlu0 %v2037, 16
        %v2085 = vpop.permute.xlu0 %2084
        %v2086 = vsel %vm398, %v2085, %v2037
        %2087 = vrot.lane.b32.xlu0 %v2040, 16
        %v2088 = vpop.permute.xlu0 %2087
        %v2089 = vsel %vm398, %v2088, %v2040
        %2090 = vrot.lane.b32.xlu0 %v2043, 16
        %v2091 = vpop.permute.xlu0 %2090
        %v2092 = vsel %vm398, %v2091, %v2043
        %2093 = vrot.lane.b32.xlu0 %v2046, 16
        %v2094 = vpop.permute.xlu0 %2093
        %v2095 = vsel %vm398, %v2094, %v2046
        %2096 = vrot.lane.b32.xlu0 %v2049, 16
        %v2097 = vpop.permute.xlu0 %2096
        %v2098 = vsel %vm398, %v2097, %v2049
        %2099 = vrot.lane.b32.xlu0 %v2052, 16
        %v2100 = vpop.permute.xlu0 %2099
        %v2101 = vsel %vm398, %v2100, %v2052
        %2102 = vrot.lane.b32.xlu0 %v2055, 16
        %v2103 = vpop.permute.xlu0 %2102
        %v2104 = vsel %vm398, %v2103, %v2055
        %2105 = vrot.lane.b32.xlu0 %v2083, 16
        %v2106 = vpop.permute.xlu0 %2105
        %2107 = vrot.lane.b32.xlu0 %v2086, 16
        %v2108 = vpop.permute.xlu0 %2107
        %2109 = vrot.lane.b32.xlu0 %v2089, 16
        %v2110 = vpop.permute.xlu0 %2109
        %2111 = vrot.lane.b32.xlu0 %v2092, 16
        %v2112 = vpop.permute.xlu0 %2111
        %2113 = vrot.lane.b32.xlu0 %v2095, 16
        %v2114 = vpop.permute.xlu0 %2113
        %2115 = vrot.lane.b32.xlu0 %v2098, 16
        %v2116 = vpop.permute.xlu0 %2115
        %2117 = vrot.lane.b32.xlu0 %v2101, 16
        %v2118 = vpop.permute.xlu0 %2117
        %2119 = vrot.lane.b32.xlu0 %v2104, 16
        %v2120 = vpop.permute.xlu0 %2119
        %v2121 = vsel %vm398, %v2106, %v2034
        %v2122 = vsel %vm398, %v2108, %v2037
        %v2123 = vsel %vm398, %v2110, %v2040
        %v2124 = vsel %vm398, %v2112, %v2043
        %v2125 = vsel %vm398, %v2114, %v2046
        %v2126 = vsel %vm398, %v2116, %v2049
        %v2127 = vsel %vm398, %v2118, %v2052
        %v2128 = vsel %vm398, %v2120, %v2055
        %2137 = vrot.lane.b32.xlu0 %v2121, 113
        %v2138 = vpop.permute.xlu0 %2137
        %2139 = vrot.lane.b32.xlu0 %v2122, 113
        %v2140 = vpop.permute.xlu0 %2139
        %2141 = vrot.lane.b32.xlu0 %v2123, 113
        %v2142 = vpop.permute.xlu0 %2141
        %2143 = vrot.lane.b32.xlu0 %v2124, 113
        %v2144 = vpop.permute.xlu0 %2143
        %2145 = vrot.lane.b32.xlu0 %v2125, 113
        %v2146 = vpop.permute.xlu0 %2145
        %2147 = vrot.lane.b32.xlu0 %v2126, 113
        %v2148 = vpop.permute.xlu0 %2147
        %2149 = vrot.lane.b32.xlu0 %v2127, 113
        %v2150 = vpop.permute.xlu0 %2149
        %2151 = vrot.lane.b32.xlu0 %v2128, 113
        %v2152 = vpop.permute.xlu0 %2151
        %v2161 = vsel %vm425, %v2138, 0.0
        %v2162 = vsel %vm425, %v2140, 0.0
        %v2163 = vsel %vm425, %v2142, 0.0
        %v2164 = vsel %vm425, %v2144, 0.0
        %v2165 = vsel %vm425, %v2146, 0.0
        %v2166 = vsel %vm425, %v2148, 0.0
        %v2167 = vsel %vm425, %v2150, 0.0
        %v2168 = vsel %vm425, %v2152, 0.0
        %v2169 = vadd.f32 %v2161, %v2058
        %v2170 = vadd.f32 %v2162, %v2061
        %v2171 = vadd.f32 %v2163, %v2064
        %v2172 = vadd.f32 %v2164, %v2067
        %v2173 = vadd.f32 %v2165, %v2070
        %v2174 = vadd.f32 %v2166, %v2073
        %v2175 = vadd.f32 %v2167, %v2076
        %v2176 = vadd.f32 %v2168, %v2079
        %v2177 = vadd.f32 %v2169, %v703
        %v2178 = vadd.f32 %v2170, %v706
        %v2179 = vadd.f32 %v2171, %v709
        %v2180 = vadd.f32 %v2172, %v712
        %v2181 = vadd.f32 %v2173, %v715
        %v2182 = vadd.f32 %v2174, %v718
        %v2183 = vadd.f32 %v2175, %v721
        %v2184 = vadd.f32 %v2176, %v724
        %v2185 = vtanh.pop %v2177
        %v2186 = vtanh.pop %v2178
        %v2187 = vtanh.pop %v2179
        %v2188 = vtanh.pop %v2180
        %v2189 = vxor.u32 %v2181, 2147483648
        %v2190 = vxor.u32 %v2182, 2147483648
        %v2191 = vxor.u32 %v2183, 2147483648
        %v2192 = vxor.u32 %v2184, 2147483648
        %v2193 = vmul.f32 %v2189, 1.442695
        %v2194 = vpow.pop %v2193
        %v2195 = vmul.f32 %v2190, 1.442695
        %v2196 = vpow.pop %v2195
        %v2197 = vmul.f32 %v2191, 1.442695
        %v2198 = vpow.pop %v2197
        %v2199 = vmul.f32 %v2192, 1.442695
        %v2200 = vpow.pop %v2199
        %v2201 = vadd.f32 %v2194, 1.0
        %v2202 = vadd.f32 %v2196, 1.0
        %v2203 = vadd.f32 %v2198, 1.0
        %v2204 = vadd.f32 %v2200, 1.0
        %v2205 = vrcp.pop %v2201
        %v2206 = vmul.f32 %v2201, %v2205
        %v2207 = vsub.f32 1.0, %v2206
        %v2208 = vmul.f32 %v2205, %v2207
        %v2209 = vadd.f32 %v2205, %v2208
        %vm2210 = vweird.f32 %v2201
        %vm2211 = vweird.f32 %v2205
        %vm2212 = vmor %vm2210, %vm2211
        %v2213 = vsel %vm2212, %v2205, %v2209
        %v2214 = vand.u32 2147483647, %v2201
        %vm2215 = vcmp.eq.f32.partialorder %v2214, 8.507059e+37
        %v2216 = vand.u32 %v2201, 2147483648
        %v2217 = vor.u32 1.1754944e-38, %v2216
        %v2218 = vsel %vm2215, %v2217, %v2213
        %v2219 = vmul.f32 1.0, %v2218
        %v2220 = vrcp.pop %v2202
        %v2221 = vmul.f32 %v2202, %v2220
        %v2222 = vsub.f32 1.0, %v2221
        %v2223 = vmul.f32 %v2220, %v2222
        %v2224 = vadd.f32 %v2220, %v2223
        %vm2225 = vweird.f32 %v2202
        %vm2226 = vweird.f32 %v2220
        %vm2227 = vmor %vm2225, %vm2226
        %v2228 = vsel %vm2227, %v2220, %v2224
        %v2229 = vand.u32 2147483647, %v2202
        %vm2230 = vcmp.eq.f32.partialorder %v2229, 8.507059e+37
        %v2231 = vand.u32 %v2202, 2147483648
        %v2232 = vor.u32 1.1754944e-38, %v2231
        %v2233 = vsel %vm2230, %v2232, %v2228
        %v2234 = vmul.f32 1.0, %v2233
        %v2235 = vrcp.pop %v2203
        %v2236 = vmul.f32 %v2203, %v2235
        %v2237 = vsub.f32 1.0, %v2236
        %v2238 = vmul.f32 %v2235, %v2237
        %v2239 = vadd.f32 %v2235, %v2238
        %vm2240 = vweird.f32 %v2203
        %vm2241 = vweird.f32 %v2235
        %vm2242 = vmor %vm2240, %vm2241
        %v2243 = vsel %vm2242, %v2235, %v2239
        %v2244 = vand.u32 2147483647, %v2203
        %vm2245 = vcmp.eq.f32.partialorder %v2244, 8.507059e+37
        %v2246 = vand.u32 %v2203, 2147483648
        %v2247 = vor.u32 1.1754944e-38, %v2246
        %v2248 = vsel %vm2245, %v2247, %v2243
        %v2249 = vmul.f32 1.0, %v2248
        %v2250 = vrcp.pop %v2204
        %v2251 = vmul.f32 %v2204, %v2250
        %v2252 = vsub.f32 1.0, %v2251
        %v2253 = vmul.f32 %v2250, %v2252
        %v2254 = vadd.f32 %v2250, %v2253
        %vm2255 = vweird.f32 %v2204
        %vm2256 = vweird.f32 %v2250
        %vm2257 = vmor %vm2255, %vm2256
        %v2258 = vsel %vm2257, %v2250, %v2254
        %v2259 = vand.u32 2147483647, %v2204
        %vm2260 = vcmp.eq.f32.partialorder %v2259, 8.507059e+37
        %v2261 = vand.u32 %v2204, 2147483648
        %v2262 = vor.u32 1.1754944e-38, %v2261
        %v2263 = vsel %vm2260, %v2262, %v2258
        %v2264 = vmul.f32 1.0, %v2263
        %v2265 = vmul.f32 %v2185, %v2219
        %v2266 = vmul.f32 %v2186, %v2234
        %v2267 = vmul.f32 %v2187, %v2249
        %v2268 = vmul.f32 %v2188, %v2264
        %s2269 = scalar_lea.vmem %s5, 192
        %v2270 = vld [vmem:[%s2269] sm:$0xff]
        %v2271 = vld [vmem:[%s2269 + $0x8] sm:$0xff]
        %v2272 = vld [vmem:[%s2269 + $0x10] sm:$0xff]
        %v2273 = vld [vmem:[%s2269 + $0x18] sm:$0xff]
        %v2274 = vld [vmem:[%s2269 + $0x20] sm:$0xff]
        %v2275 = vld [vmem:[%s2269 + $0x28] sm:$0xff]
        %v2276 = vld [vmem:[%s2269 + $0x30] sm:$0xff]
        %v2277 = vld [vmem:[%s2269 + $0x38] sm:$0xff]
        %v2279 = vsel %vm766, %v2270, 0
        %v2282 = vsel %vm766, %v2271, 0
        %v2285 = vsel %vm766, %v2272, 0
        %v2288 = vsel %vm766, %v2273, 0
        %v2291 = vsel %vm766, %v2274, 0
        %v2294 = vsel %vm766, %v2275, 0
        %v2297 = vsel %vm766, %v2276, 0
        %v2300 = vsel %vm766, %v2277, 0
        %2302 = vmatpush.msra.mxu0 0.0
        %2303 = vmatpush.msra.mxu0 0.0
        %2304 = vmatpush.msra.mxu0 0.0
        %2305 = vmatpush.msra.mxu0 0.0
        %2306 = vmatpush.msra.mxu0 0.0
        %2307 = vmatpush.msra.mxu0 0.0
        %2308 = vmatpush.msra.mxu0 0.0
        %2309 = vmatpush.msra.mxu0 0.0
        %2310 = vmatpush.msra.mxu0 0.0
        %2311 = vmatpush.msra.mxu0 0.0
        %2312 = vmatpush.msra.mxu0 0.0
        %2313 = vmatpush.msra.mxu0 0.0
        %2314 = vmatpush.msra.mxu0 %v2268
        %2315 = vmatpush.msra.mxu0 %v2267
        %2316 = vmatpush.msra.mxu0 %v2266
        %2317 = vmatpush.msra.mxu0 %v2265
        %2318 = vmatmul.f32.gmra.mxu0 %v2279
        %v2319 = vpop.f32.mrf.mxu0
        %v2320 = vadd.f32 0.0, %v2319
        %2321 = vmatmul.f32.gmra.mxu0 %v2282
        %v2322 = vpop.f32.mrf.mxu0
        %v2323 = vadd.f32 0.0, %v2322
        %2324 = vmatmul.f32.gmra.mxu0 %v2285
        %v2325 = vpop.f32.mrf.mxu0
        %v2326 = vadd.f32 0.0, %v2325
        %2327 = vmatmul.f32.gmra.mxu0 %v2288
        %v2328 = vpop.f32.mrf.mxu0
        %v2329 = vadd.f32 0.0, %v2328
        %2330 = vmatmul.f32.gmra.mxu0 %v2291
        %v2331 = vpop.f32.mrf.mxu0
        %v2332 = vadd.f32 0.0, %v2331
        %2333 = vmatmul.f32.gmra.mxu0 %v2294
        %v2334 = vpop.f32.mrf.mxu0
        %v2335 = vadd.f32 0.0, %v2334
        %2336 = vmatmul.f32.gmra.mxu0 %v2297
        %v2337 = vpop.f32.mrf.mxu0
        %v2338 = vadd.f32 0.0, %v2337
        %2339 = vmatmul.f32.gmra.mxu0 %v2300
        %v2340 = vpop.f32.mrf.mxu0
        %v2341 = vadd.f32 0.0, %v2340
        %2342 = vdwg.mxu0
        %v2343 = vadd.f32 %v1943, %v2320
        %v2344 = vadd.f32 %v1944, %v2323
        %v2345 = vadd.f32 %v1945, %v2326
        %v2346 = vadd.f32 %v1946, %v2329
        %v2347 = vadd.f32 %v1947, %v2332
        %v2348 = vadd.f32 %v1948, %v2335
        %v2349 = vadd.f32 %v1949, %v2338
        %v2350 = vadd.f32 %v1950, %v2341
        %s2351 = scalar_lea.vmem %s3, 512
        %v2352 = vld [vmem:[%s2351] sm:$0xff]
        %v2353 = vld [vmem:[%s2351 + $0x8] sm:$0xff]
        %v2354 = vld [vmem:[%s2351 + $0x10] sm:$0xff]
        %v2355 = vld [vmem:[%s2351 + $0x18] sm:$0xff]
        %v2356 = vld [vmem:[%s2351 + $0x20] sm:$0xff]
        %v2357 = vld [vmem:[%s2351 + $0x28] sm:$0xff]
        %v2358 = vld [vmem:[%s2351 + $0x30] sm:$0xff]
        %v2359 = vld [vmem:[%s2351 + $0x38] sm:$0xff]
        %v2360 = vld [vmem:[%s2351 + $0x40] sm:$0xff]
        %v2361 = vld [vmem:[%s2351 + $0x48] sm:$0xff]
        %v2362 = vld [vmem:[%s2351 + $0x50] sm:$0xff]
        %v2363 = vld [vmem:[%s2351 + $0x58] sm:$0xff]
        %v2364 = vld [vmem:[%s2351 + $0x60] sm:$0xff]
        %v2365 = vld [vmem:[%s2351 + $0x68] sm:$0xff]
        %v2366 = vld [vmem:[%s2351 + $0x70] sm:$0xff]
        %v2367 = vld [vmem:[%s2351 + $0x78] sm:$0xff]
        %v2369 = vsel %vm766, %v2352, 0
        %v2372 = vsel %vm766, %v2353, 0
        %v2375 = vsel %vm766, %v2354, 0
        %v2378 = vsel %vm766, %v2355, 0
        %v2381 = vsel %vm766, %v2356, 0
        %v2384 = vsel %vm766, %v2357, 0
        %v2387 = vsel %vm766, %v2358, 0
        %v2390 = vsel %vm766, %v2359, 0
        %v2393 = vsel %vm766, %v2360, 0
        %v2396 = vsel %vm766, %v2361, 0
        %v2399 = vsel %vm766, %v2362, 0
        %v2402 = vsel %vm766, %v2363, 0
        %v2405 = vsel %vm766, %v2364, 0
        %v2408 = vsel %vm766, %v2365, 0
        %v2411 = vsel %vm766, %v2366, 0
        %v2414 = vsel %vm766, %v2367, 0
        %2416 = vmatpush.msra.mxu0 0.0
        %2417 = vmatpush.msra.mxu0 0.0
        %2418 = vmatpush.msra.mxu0 0.0
        %2419 = vmatpush.msra.mxu0 0.0
        %2420 = vmatpush.msra.mxu0 0.0
        %2421 = vmatpush.msra.mxu0 0.0
        %2422 = vmatpush.msra.mxu0 0.0
        %2423 = vmatpush.msra.mxu0 0.0
        %2424 = vmatpush.msra.mxu0 0.0
        %2425 = vmatpush.msra.mxu0 0.0
        %2426 = vmatpush.msra.mxu0 0.0
        %2427 = vmatpush.msra.mxu0 0.0
        %2428 = vmatpush.msra.mxu0 %v2346
        %2429 = vmatpush.msra.mxu0 %v2345
        %2430 = vmatpush.msra.mxu0 %v2344
        %2431 = vmatpush.msra.mxu0 %v2343
        %2432 = vmatmul.f32.gmra.mxu0 %v2369
        %v2433 = vpop.f32.mrf.mxu0
        %v2434 = vadd.f32 0.0, %v2433
        %2435 = vmatmul.f32.gmra.mxu0 %v2372
        %v2436 = vpop.f32.mrf.mxu0
        %v2437 = vadd.f32 0.0, %v2436
        %2438 = vmatmul.f32.gmra.mxu0 %v2375
        %v2439 = vpop.f32.mrf.mxu0
        %v2440 = vadd.f32 0.0, %v2439
        %2441 = vmatmul.f32.gmra.mxu0 %v2378
        %v2442 = vpop.f32.mrf.mxu0
        %v2443 = vadd.f32 0.0, %v2442
        %2444 = vmatmul.f32.gmra.mxu0 %v2381
        %v2445 = vpop.f32.mrf.mxu0
        %v2446 = vadd.f32 0.0, %v2445
        %2447 = vmatmul.f32.gmra.mxu0 %v2384
        %v2448 = vpop.f32.mrf.mxu0
        %v2449 = vadd.f32 0.0, %v2448
        %2450 = vmatmul.f32.gmra.mxu0 %v2387
        %v2451 = vpop.f32.mrf.mxu0
        %v2452 = vadd.f32 0.0, %v2451
        %2453 = vmatmul.f32.gmra.mxu0 %v2390
        %v2454 = vpop.f32.mrf.mxu0
        %v2455 = vadd.f32 0.0, %v2454
        %2456 = vmatmul.f32.gmra.mxu0 %v2393
        %v2457 = vpop.f32.mrf.mxu0
        %v2458 = vadd.f32 0.0, %v2457
        %2459 = vmatmul.f32.gmra.mxu0 %v2396
        %v2460 = vpop.f32.mrf.mxu0
        %v2461 = vadd.f32 0.0, %v2460
        %2462 = vmatmul.f32.gmra.mxu0 %v2399
        %v2463 = vpop.f32.mrf.mxu0
        %v2464 = vadd.f32 0.0, %v2463
        %2465 = vmatmul.f32.gmra.mxu0 %v2402
        %v2466 = vpop.f32.mrf.mxu0
        %v2467 = vadd.f32 0.0, %v2466
        %2468 = vmatmul.f32.gmra.mxu0 %v2405
        %v2469 = vpop.f32.mrf.mxu0
        %v2470 = vadd.f32 0.0, %v2469
        %2471 = vmatmul.f32.gmra.mxu0 %v2408
        %v2472 = vpop.f32.mrf.mxu0
        %v2473 = vadd.f32 0.0, %v2472
        %2474 = vmatmul.f32.gmra.mxu0 %v2411
        %v2475 = vpop.f32.mrf.mxu0
        %v2476 = vadd.f32 0.0, %v2475
        %2477 = vmatmul.f32.gmra.mxu0 %v2414
        %v2478 = vpop.f32.mrf.mxu0
        %v2479 = vadd.f32 0.0, %v2478
        %2480 = vdwg.mxu0
        %2481 = vrot.lane.b32.xlu0 %v2434, 16
        %v2482 = vpop.permute.xlu0 %2481
        %v2483 = vsel %vm398, %v2482, %v2434
        %2484 = vrot.lane.b32.xlu0 %v2437, 16
        %v2485 = vpop.permute.xlu0 %2484
        %v2486 = vsel %vm398, %v2485, %v2437
        %2487 = vrot.lane.b32.xlu0 %v2440, 16
        %v2488 = vpop.permute.xlu0 %2487
        %v2489 = vsel %vm398, %v2488, %v2440
        %2490 = vrot.lane.b32.xlu0 %v2443, 16
        %v2491 = vpop.permute.xlu0 %2490
        %v2492 = vsel %vm398, %v2491, %v2443
        %2493 = vrot.lane.b32.xlu0 %v2446, 16
        %v2494 = vpop.permute.xlu0 %2493
        %v2495 = vsel %vm398, %v2494, %v2446
        %2496 = vrot.lane.b32.xlu0 %v2449, 16
        %v2497 = vpop.permute.xlu0 %2496
        %v2498 = vsel %vm398, %v2497, %v2449
        %2499 = vrot.lane.b32.xlu0 %v2452, 16
        %v2500 = vpop.permute.xlu0 %2499
        %v2501 = vsel %vm398, %v2500, %v2452
        %2502 = vrot.lane.b32.xlu0 %v2455, 16
        %v2503 = vpop.permute.xlu0 %2502
        %v2504 = vsel %vm398, %v2503, %v2455
        %2505 = vrot.lane.b32.xlu0 %v2483, 16
        %v2506 = vpop.permute.xlu0 %2505
        %2507 = vrot.lane.b32.xlu0 %v2486, 16
        %v2508 = vpop.permute.xlu0 %2507
        %2509 = vrot.lane.b32.xlu0 %v2489, 16
        %v2510 = vpop.permute.xlu0 %2509
        %2511 = vrot.lane.b32.xlu0 %v2492, 16
        %v2512 = vpop.permute.xlu0 %2511
        %2513 = vrot.lane.b32.xlu0 %v2495, 16
        %v2514 = vpop.permute.xlu0 %2513
        %2515 = vrot.lane.b32.xlu0 %v2498, 16
        %v2516 = vpop.permute.xlu0 %2515
        %2517 = vrot.lane.b32.xlu0 %v2501, 16
        %v2518 = vpop.permute.xlu0 %2517
        %2519 = vrot.lane.b32.xlu0 %v2504, 16
        %v2520 = vpop.permute.xlu0 %2519
        %v2521 = vsel %vm398, %v2506, %v2434
        %v2522 = vsel %vm398, %v2508, %v2437
        %v2523 = vsel %vm398, %v2510, %v2440
        %v2524 = vsel %vm398, %v2512, %v2443
        %v2525 = vsel %vm398, %v2514, %v2446
        %v2526 = vsel %vm398, %v2516, %v2449
        %v2527 = vsel %vm398, %v2518, %v2452
        %v2528 = vsel %vm398, %v2520, %v2455
        %2537 = vrot.lane.b32.xlu0 %v2521, 114
        %v2538 = vpop.permute.xlu0 %2537
        %2539 = vrot.lane.b32.xlu0 %v2522, 114
        %v2540 = vpop.permute.xlu0 %2539
        %2541 = vrot.lane.b32.xlu0 %v2523, 114
        %v2542 = vpop.permute.xlu0 %2541
        %2543 = vrot.lane.b32.xlu0 %v2524, 114
        %v2544 = vpop.permute.xlu0 %2543
        %2545 = vrot.lane.b32.xlu0 %v2525, 114
        %v2546 = vpop.permute.xlu0 %2545
        %2547 = vrot.lane.b32.xlu0 %v2526, 114
        %v2548 = vpop.permute.xlu0 %2547
        %2549 = vrot.lane.b32.xlu0 %v2527, 114
        %v2550 = vpop.permute.xlu0 %2549
        %2551 = vrot.lane.b32.xlu0 %v2528, 114
        %v2552 = vpop.permute.xlu0 %2551
        %v2561 = vsel %vm1327, %v2538, 0.0
        %v2562 = vsel %vm1327, %v2540, 0.0
        %v2563 = vsel %vm1327, %v2542, 0.0
        %v2564 = vsel %vm1327, %v2544, 0.0
        %v2565 = vsel %vm1327, %v2546, 0.0
        %v2566 = vsel %vm1327, %v2548, 0.0
        %v2567 = vsel %vm1327, %v2550, 0.0
        %v2568 = vsel %vm1327, %v2552, 0.0
        %v2569 = vadd.f32 %v2561, %v2458
        %v2570 = vadd.f32 %v2562, %v2461
        %v2571 = vadd.f32 %v2563, %v2464
        %v2572 = vadd.f32 %v2564, %v2467
        %v2573 = vadd.f32 %v2565, %v2470
        %v2574 = vadd.f32 %v2566, %v2473
        %v2575 = vadd.f32 %v2567, %v2476
        %v2576 = vadd.f32 %v2568, %v2479
        %v2577 = vadd.f32 %v2569, %v727
        %v2578 = vadd.f32 %v2570, %v730
        %v2579 = vadd.f32 %v2571, %v733
        %v2580 = vadd.f32 %v2572, %v736
        %v2581 = vadd.f32 %v2573, %v739
        %v2582 = vadd.f32 %v2574, %v742
        %v2583 = vadd.f32 %v2575, %v745
        %v2584 = vadd.f32 %v2576, %v748
        %v2585 = vtanh.pop %v2577
        %v2586 = vtanh.pop %v2578
        %v2587 = vtanh.pop %v2579
        %v2588 = vtanh.pop %v2580
        %v2589 = vxor.u32 %v2581, 2147483648
        %v2590 = vxor.u32 %v2582, 2147483648
        %v2591 = vxor.u32 %v2583, 2147483648
        %v2592 = vxor.u32 %v2584, 2147483648
        %v2593 = vmul.f32 %v2589, 1.442695
        %v2594 = vpow.pop %v2593
        %v2595 = vmul.f32 %v2590, 1.442695
        %v2596 = vpow.pop %v2595
        %v2597 = vmul.f32 %v2591, 1.442695
        %v2598 = vpow.pop %v2597
        %v2599 = vmul.f32 %v2592, 1.442695
        %v2600 = vpow.pop %v2599
        %v2601 = vadd.f32 %v2594, 1.0
        %v2602 = vadd.f32 %v2596, 1.0
        %v2603 = vadd.f32 %v2598, 1.0
        %v2604 = vadd.f32 %v2600, 1.0
        %v2605 = vrcp.pop %v2601
        %v2606 = vmul.f32 %v2601, %v2605
        %v2607 = vsub.f32 1.0, %v2606
        %v2608 = vmul.f32 %v2605, %v2607
        %v2609 = vadd.f32 %v2605, %v2608
        %vm2610 = vweird.f32 %v2601
        %vm2611 = vweird.f32 %v2605
        %vm2612 = vmor %vm2610, %vm2611
        %v2613 = vsel %vm2612, %v2605, %v2609
        %v2614 = vand.u32 2147483647, %v2601
        %vm2615 = vcmp.eq.f32.partialorder %v2614, 8.507059e+37
        %v2616 = vand.u32 %v2601, 2147483648
        %v2617 = vor.u32 1.1754944e-38, %v2616
        %v2618 = vsel %vm2615, %v2617, %v2613
        %v2619 = vmul.f32 1.0, %v2618
        %v2620 = vrcp.pop %v2602
        %v2621 = vmul.f32 %v2602, %v2620
        %v2622 = vsub.f32 1.0, %v2621
        %v2623 = vmul.f32 %v2620, %v2622
        %v2624 = vadd.f32 %v2620, %v2623
        %vm2625 = vweird.f32 %v2602
        %vm2626 = vweird.f32 %v2620
        %vm2627 = vmor %vm2625, %vm2626
        %v2628 = vsel %vm2627, %v2620, %v2624
        %v2629 = vand.u32 2147483647, %v2602
        %vm2630 = vcmp.eq.f32.partialorder %v2629, 8.507059e+37
        %v2631 = vand.u32 %v2602, 2147483648
        %v2632 = vor.u32 1.1754944e-38, %v2631
        %v2633 = vsel %vm2630, %v2632, %v2628
        %v2634 = vmul.f32 1.0, %v2633
        %v2635 = vrcp.pop %v2603
        %v2636 = vmul.f32 %v2603, %v2635
        %v2637 = vsub.f32 1.0, %v2636
        %v2638 = vmul.f32 %v2635, %v2637
        %v2639 = vadd.f32 %v2635, %v2638
        %vm2640 = vweird.f32 %v2603
        %vm2641 = vweird.f32 %v2635
        %vm2642 = vmor %vm2640, %vm2641
        %v2643 = vsel %vm2642, %v2635, %v2639
        %v2644 = vand.u32 2147483647, %v2603
        %vm2645 = vcmp.eq.f32.partialorder %v2644, 8.507059e+37
        %v2646 = vand.u32 %v2603, 2147483648
        %v2647 = vor.u32 1.1754944e-38, %v2646
        %v2648 = vsel %vm2645, %v2647, %v2643
        %v2649 = vmul.f32 1.0, %v2648
        %v2650 = vrcp.pop %v2604
        %v2651 = vmul.f32 %v2604, %v2650
        %v2652 = vsub.f32 1.0, %v2651
        %v2653 = vmul.f32 %v2650, %v2652
        %v2654 = vadd.f32 %v2650, %v2653
        %vm2655 = vweird.f32 %v2604
        %vm2656 = vweird.f32 %v2650
        %vm2657 = vmor %vm2655, %vm2656
        %v2658 = vsel %vm2657, %v2650, %v2654
        %v2659 = vand.u32 2147483647, %v2604
        %vm2660 = vcmp.eq.f32.partialorder %v2659, 8.507059e+37
        %v2661 = vand.u32 %v2604, 2147483648
        %v2662 = vor.u32 1.1754944e-38, %v2661
        %v2663 = vsel %vm2660, %v2662, %v2658
        %v2664 = vmul.f32 1.0, %v2663
        %v2665 = vmul.f32 %v2585, %v2619
        %v2666 = vmul.f32 %v2586, %v2634
        %v2667 = vmul.f32 %v2587, %v2649
        %v2668 = vmul.f32 %v2588, %v2664
        %s2669 = scalar_lea.vmem %s5, 256
        %v2670 = vld [vmem:[%s2669] sm:$0xff]
        %v2671 = vld [vmem:[%s2669 + $0x8] sm:$0xff]
        %v2672 = vld [vmem:[%s2669 + $0x10] sm:$0xff]
        %v2673 = vld [vmem:[%s2669 + $0x18] sm:$0xff]
        %v2674 = vld [vmem:[%s2669 + $0x20] sm:$0xff]
        %v2675 = vld [vmem:[%s2669 + $0x28] sm:$0xff]
        %v2676 = vld [vmem:[%s2669 + $0x30] sm:$0xff]
        %v2677 = vld [vmem:[%s2669 + $0x38] sm:$0xff]
        %v2679 = vsel %vm766, %v2670, 0
        %v2682 = vsel %vm766, %v2671, 0
        %v2685 = vsel %vm766, %v2672, 0
        %v2688 = vsel %vm766, %v2673, 0
        %v2691 = vsel %vm766, %v2674, 0
        %v2694 = vsel %vm766, %v2675, 0
        %v2697 = vsel %vm766, %v2676, 0
        %v2700 = vsel %vm766, %v2677, 0
        %2702 = vmatpush.msra.mxu0 0.0
        %2703 = vmatpush.msra.mxu0 0.0
        %2704 = vmatpush.msra.mxu0 0.0
        %2705 = vmatpush.msra.mxu0 0.0
        %2706 = vmatpush.msra.mxu0 0.0
        %2707 = vmatpush.msra.mxu0 0.0
        %2708 = vmatpush.msra.mxu0 0.0
        %2709 = vmatpush.msra.mxu0 0.0
        %2710 = vmatpush.msra.mxu0 0.0
        %2711 = vmatpush.msra.mxu0 0.0
        %2712 = vmatpush.msra.mxu0 0.0
        %2713 = vmatpush.msra.mxu0 0.0
        %2714 = vmatpush.msra.mxu0 %v2668
        %2715 = vmatpush.msra.mxu0 %v2667
        %2716 = vmatpush.msra.mxu0 %v2666
        %2717 = vmatpush.msra.mxu0 %v2665
        %2718 = vmatmul.f32.gmra.mxu0 %v2679
        %v2719 = vpop.f32.mrf.mxu0
        %2720 = vmatmul.f32.gmra.mxu0 %v2682
        %v2721 = vpop.f32.mrf.mxu0
        %2722 = vmatmul.f32.gmra.mxu0 %v2685
        %v2723 = vpop.f32.mrf.mxu0
        %2724 = vmatmul.f32.gmra.mxu0 %v2688
        %v2725 = vpop.f32.mrf.mxu0
        %2726 = vmatmul.f32.gmra.mxu0 %v2691
        %v2727 = vpop.f32.mrf.mxu0
        %v2728 = vadd.f32 0.0, %v2727
        %2729 = vmatmul.f32.gmra.mxu0 %v2694
        %v2730 = vpop.f32.mrf.mxu0
        %v2731 = vadd.f32 0.0, %v2730
        %2732 = vmatmul.f32.gmra.mxu0 %v2697
        %v2733 = vpop.f32.mrf.mxu0
        %v2734 = vadd.f32 0.0, %v2733
        %2735 = vmatmul.f32.gmra.mxu0 %v2700
        %v2736 = vpop.f32.mrf.mxu0
        %v2737 = vadd.f32 0.0, %v2736
        %2738 = vdwg.mxu0
        %v2739 = vadd.f32 %v2347, %v2728
        %v2740 = vadd.f32 %v2348, %v2731
        %v2741 = vadd.f32 %v2349, %v2734
        %v2742 = vadd.f32 %v2350, %v2737
        %v2743 = vld [vmem:[%s6] sm:$0xff]
        %v2744 = vld [vmem:[%s6 + $0x8] sm:$0xff]
        %v2745 = vld [vmem:[%s6 + $0x10] sm:$0xff]
        %v2746 = vld [vmem:[%s6 + $0x18] sm:$0xff]
        %v2748 = vsel %vm328, %v2743, 0
        %v2751 = vsel %vm328, %v2744, 0
        %v2754 = vsel %vm328, %v2745, 0
        %v2757 = vsel %vm328, %v2746, 0
        %2759 = vmatpush.msra.mxu0 0.0
        %2760 = vmatpush.msra.mxu0 0.0
        %2761 = vmatpush.msra.mxu0 0.0
        %2762 = vmatpush.msra.mxu0 0.0
        %2763 = vmatpush.msra.mxu0 0.0
        %2764 = vmatpush.msra.mxu0 0.0
        %2765 = vmatpush.msra.mxu0 0.0
        %2766 = vmatpush.msra.mxu0 0.0
        %2767 = vmatpush.msra.mxu0 0.0
        %2768 = vmatpush.msra.mxu0 0.0
        %2769 = vmatpush.msra.mxu0 0.0
        %2770 = vmatpush.msra.mxu0 0.0
        %2771 = vmatpush.msra.mxu0 0.0
        %2772 = vmatpush.msra.mxu0 0.0
        %2773 = vmatpush.msra.mxu0 0.0
        %2774 = vmatpush.msra.mxu0 %v611
        %2775 = vmatmul.f32.gmra.mxu0 %v2748
        %v2776 = vpop.f32.mrf.mxu0
        %v2777 = vadd.f32 0.0, %v2776
        %2778 = vmatmul.f32.gmra.mxu0 %v2751
        %v2779 = vpop.f32.mrf.mxu0
        %v2780 = vadd.f32 0.0, %v2779
        %2781 = vmatmul.f32.gmra.mxu0 %v2754
        %v2782 = vpop.f32.mrf.mxu0
        %v2783 = vadd.f32 0.0, %v2782
        %2784 = vmatmul.f32.gmra.mxu0 %v2757
        %v2785 = vpop.f32.mrf.mxu0
        %v2786 = vadd.f32 0.0, %v2785
        %2787 = vdwg.mxu0
        %v2788 = vadd.f32 %v2739, %v2777
        %v2789 = vadd.f32 %v2740, %v2780
        %v2790 = vadd.f32 %v2741, %v2783
        %v2791 = vadd.f32 %v2742, %v2786
        %v2792 = vtanh.pop %v2788
        %v2793 = vtanh.pop %v2789
        %v2794 = vtanh.pop %v2790
        %v2795 = vtanh.pop %v2791
        %v2796 = vld [vmem:[%s7] sm:$0xf]
        %v2798 = vsel %vm766, %v2796, 0
        %2800 = vmatpush.msra.mxu0 0.0
        %2801 = vmatpush.msra.mxu0 0.0
        %2802 = vmatpush.msra.mxu0 0.0
        %2803 = vmatpush.msra.mxu0 0.0
        %2804 = vmatpush.msra.mxu0 0.0
        %2805 = vmatpush.msra.mxu0 0.0
        %2806 = vmatpush.msra.mxu0 0.0
        %2807 = vmatpush.msra.mxu0 0.0
        %2808 = vmatpush.msra.mxu0 0.0
        %2809 = vmatpush.msra.mxu0 0.0
        %2810 = vmatpush.msra.mxu0 0.0
        %2811 = vmatpush.msra.mxu0 0.0
        %2812 = vmatpush.msra.mxu0 %v2795
        %2813 = vmatpush.msra.mxu0 %v2794
        %2814 = vmatpush.msra.mxu0 %v2793
        %2815 = vmatpush.msra.mxu0 %v2792
        %2816 = vmatmul.f32.gmra.mxu0 %v2798
        %v2817 = vpop.f32.mrf.mxu0
        %v2818 = vadd.f32 0.0, %v2817
        %2819 = vdwg.mxu0
        %v2820 = vxor.u32 %v2818, 2147483648
        %v2821 = vmul.f32 %v2820, 1.442695
        %v2822 = vpow.pop %v2821
        %v2823 = vadd.f32 %v2822, 1.0
        %v2824 = vrcp.pop %v2823
        %v2825 = vmul.f32 %v2823, %v2824
        %v2826 = vsub.f32 1.0, %v2825
        %v2827 = vmul.f32 %v2824, %v2826
        %v2828 = vadd.f32 %v2824, %v2827
        %vm2829 = vweird.f32 %v2823
        %vm2830 = vweird.f32 %v2824
        %vm2831 = vmor %vm2829, %vm2830
        %v2832 = vsel %vm2831, %v2824, %v2828
        %v2833 = vand.u32 2147483647, %v2823
        %vm2834 = vcmp.eq.f32.partialorder %v2833, 8.507059e+37
        %v2835 = vand.u32 %v2823, 2147483648
        %v2836 = vor.u32 1.1754944e-38, %v2835
        %v2837 = vsel %vm2834, %v2836, %v2832
        %v2838 = vmul.f32 1.0, %v2837
        %vm2839 = vcmask 125952
        %2840 = vst.msk [vmem:[%s309] sm:$0xf] %vm2839, %v2838
        %s2841 = sand.u32 %s208, 1
        %s2842 = scalar_lea.sflag [#allocation3], %s2841
        %s2843 = sand.u32 %s208, 1
        %s2844 = smul.addr %s2843, 4
        %s2845 = scalar_lea.vmem [#allocation2], %s2844
        // Predicated region
        $region53: #{tpu_custom_call.1} parent=51 // pred_check
          %p2846 = pneg %p218
        $region54: #{tpu_custom_call.1} parent=51 // pred_check_branch
          %2848 = sbr.rel (%p2846) target = $region56
        $region55: #{tpu_custom_call.1} parent=51 // pred_region
          %2850 = vsyncadd %s2842, 0
          %s2851 = smul.addr %s22, 4
          %s2852 = scalar_lea.hbm %s8, %s2851
          %s2854 = sshll.u32 %s2845, 4
          %s2855 = int_to_ptr.vmem [resolvable:$true] %s2854
          %s2856 = sshll.u32 %s2852, 4
          %s2857 = int_to_ptr.hbm [resolvable:$true] %s2856
          %2859 = dma.vmem_to_hbm [thread:$0]  %s2855, 64, %s2857, %s2842
        $region56: #{tpu_custom_call.1} parent=51 // pred_fallthru
          _
      $region52: #{tpu_custom_call.1} parent=5 // pred_fallthru
        _
      %p2860 = scmp.le.s32.totalorder 2, %s17
      // Predicated region
      $region57: #{tpu_custom_call.1} parent=5 // pred_check
        %p2861 = pneg %p2860
      $region58: #{tpu_custom_call.1} parent=5 // pred_check_branch
        %2863 = sbr.rel (%p2861) target = $region60
      $region59: #{tpu_custom_call.1} parent=5 // pred_region
        %s2864 = ssub.s32 %s17, 2
        // Predicated region
        $region61: #{tpu_custom_call.1} parent=59 // pred_check
          %p2865 = pneg %p224
        $region62: #{tpu_custom_call.1} parent=59 // pred_check_branch
          %2867 = sbr.rel (%p2865) target = $region64
        $region63: #{tpu_custom_call.1} parent=59 // pred_region
          %s2868 = sand.u32 %s209, 1
          %s2869 = scalar_lea.sflag [#allocation3], %s2868
          %s2870 = sand.u32 %s209, 1
          %s2871 = smul.addr %s2870, 4
          %s2872 = scalar_lea.vmem [#allocation2], %s2871
          %2874 = dma.done %s2869, 64
        $region64: #{tpu_custom_call.1} parent=59 // pred_fallthru
          _
      $region60: #{tpu_custom_call.1} parent=5 // pred_fallthru
        _
    $region6: #{tpu_custom_call.1} parent=1 // loop_footer
      %s21 = sadd.s32 1, %s17
    $region7: #{tpu_custom_call.1} parent=1 // loop_footer_branch
      %16 = sbr.rel target = $region3
    $region8: #{tpu_custom_call.1} parent=1 // loop_exit
      _
    %2875 = vsyncpa [#allocation3], 1
    %s2876 = scalar_lea.sflag [#allocation3], 1
    %2877 = vsyncpa %s2876, 1

</llo_original>
